<compile_context>
chip_gen: v6e
topology: v6e:2x2x1
jax: 0.10.0
libtpu: 0.0.40
codegen_flags: <defaults>
</compile_context>

<pallas_src>
import jax
import jax.numpy as jnp
from jax import lax
from jax.experimental import pallas as pl
from jax.experimental.pallas import tpu as pltpu

_EPS = 1e-5          # torch GroupNorm default
_VEC_ROWS = 16       # packed small-vector array rows (multiple of the 8-sublane tile)


def _convproj_kernel(
    x_ref,            # (Bt, 4P, Cin)  k-major window rows for Bt samples
    wp_ref,           # point : (Cin, Cout)
    w1_ref,           # conv1 : (Cin, Cout)
    w3_ref,           # conv3 : (Cout, Cout)
    vec_ref,          # (16, Cout) packed: rows 0-3 = conv2 taps * g1, 4 = bp,
                      #   5 = b1, 6 = b2 + be1*sum_k(w2), 7 = b3, 8 = g2, 9 = be2
    o_ref,            # (Bt, P, Cout)
):
    Bt, P, Cout = o_ref.shape
    R = x_ref.shape[1]            # 4 * P
    Cin = x_ref.shape[2]

    x = x_ref[...]                                                  # (Bt, 4P, Cin)

    # packed small vectors (static ref slices are free)
    w2f = vec_ref[0:4, :]                                           # (4, Cout)
    bp = vec_ref[4:5, :]
    b1 = vec_ref[5:6, :]
    b2f = vec_ref[6:7, :]
    b3 = vec_ref[7:8, :]
    g2 = vec_ref[8:9, :]
    be2 = vec_ref[9:10, :]

    # ---- main branch -------------------------------------------------------
    # conv1 (1x1): channel matmul on the MXU.
    t1 = jnp.dot(x.reshape(Bt * R, Cin), w1_ref[...],
                 preferred_element_type=jnp.float32) + b1
    t1 = t1.reshape(Bt, R, Cout)

    # norm1: GroupNorm(1, C) — per-sample stats in ONE pass (sum, sum-of-squares);
    # the affine (g1, be1) is pre-folded into the conv2 taps / bias in the wrapper.
    n1 = R * Cout
    s1 = jnp.sum(jnp.sum(t1, axis=2, keepdims=True), axis=1, keepdims=True)
    q1 = jnp.sum(jnp.sum(t1 * t1, axis=2, keepdims=True), axis=1, keepdims=True)
    mu1 = s1 / n1
    var1 = q1 / n1 - mu1 * mu1
    t1 = (t1 - mu1) * lax.rsqrt(var1 + _EPS)

    # conv2: depthwise 2x2 / stride 2 -> per-channel weighted sum of the 4
    # contiguous k-major row chunks (g1 folded into w2f, be1 folded into b2f).
    y = (t1[:, 0 * P:1 * P, :] * w2f[0:1, :]
         + t1[:, 1 * P:2 * P, :] * w2f[1:2, :]
         + t1[:, 2 * P:3 * P, :] * w2f[2:3, :]
         + t1[:, 3 * P:4 * P, :] * w2f[3:4, :]) + b2f               # (Bt, P, Cout)

    # conv3 (1x1).
    y = (jnp.dot(y.reshape(Bt * P, Cout), w3_ref[...],
                 preferred_element_type=jnp.float32) + b3).reshape(Bt, P, Cout)

    # norm2: single-pass stats; affine applied as a single FMA (scale/shift).
    n2 = P * Cout
    s2 = jnp.sum(jnp.sum(y, axis=2, keepdims=True), axis=1, keepdims=True)
    q2 = jnp.sum(jnp.sum(y * y, axis=2, keepdims=True), axis=1, keepdims=True)
    mu2 = s2 / n2
    var2 = q2 / n2 - mu2 * mu2
    scale = lax.rsqrt(var2 + _EPS) * g2                             # (Bt, 1, Cout)
    shift = be2 - mu2 * scale                                       # (Bt, 1, Cout)

    # ---- shortcut: 2x2/2 average pool FIRST (on Cin lanes), then point conv --
    scx = 0.25 * (x[:, 0 * P:1 * P, :] + x[:, 1 * P:2 * P, :]
                  + x[:, 2 * P:3 * P, :] + x[:, 3 * P:4 * P, :])    # (Bt, P, Cin)
    sc = (jnp.dot(scx.reshape(Bt * P, Cin), wp_ref[...],
                  preferred_element_type=jnp.float32) + bp).reshape(Bt, P, Cout)

    o_ref[...] = (y * scale + shift + sc).astype(o_ref.dtype)


def _pack_vectors(params):
    """Fold GroupNorm1's affine into conv2 and pack all small vectors into one
    (16, Cout) array (single ref / DMA / VMEM tile)."""
    Cout = params["w1"].shape[1]
    w2f = params["w2"] * params["g1"]                                        # (4, Cout)
    b2f = params["b2"] + params["be1"] * jnp.sum(params["w2"], axis=0, keepdims=True)
    vecs = jnp.concatenate(
        [w2f, params["bp"], params["b1"], b2f, params["b3"],
         params["g2"], params["be2"]], axis=0)                               # (10, Cout)
    pad = jnp.zeros((_VEC_ROWS - vecs.shape[0], Cout), jnp.float32)
    return jnp.concatenate([vecs, pad], axis=0)                              # (16, Cout)


def _pick_batch_tile(B, P, Cout, vmem_budget_bytes=24 << 20):
    """Samples per grid step: amortize the ~0.35us per-step overhead, but keep the
    grid length >= 2 (v7x shards the 'parallel' axis over 2 TCs) and stay inside a
    conservative VMEM budget (x block is lane-padded to 128 lanes, double-buffered)."""
    per_sample = 4 * P * (Cout + 128) * 4 * 3
    cap = max(1, vmem_budget_bytes // max(per_sample, 1))
    cap = min(int(cap), max(1, B // 2))
    bt = 1
    for d in range(1, cap + 1):
        if B % d == 0:
            bt = d
    return bt


def conv_proj_forward(x_nchw, params, batch_tile=None):
    """x_nchw: (B, Cin, H, W) f32. Returns (B, Cout, H//2, W//2) f32."""
    B, Cin, H, W = x_nchw.shape
    assert H % 2 == 0 and W % 2 == 0, "kernel_size=stride=2 path needs even H, W"
    Ho, Wo = H // 2, W // 2
    P = Ho * Wo
    Cout = params["w1"].shape[1]
    Bt = batch_tile if batch_tile is not None else _pick_batch_tile(B, P, Cout)
    assert B % Bt == 0

    # Layout plumbing in plain JAX: NCHW -> NHWC -> k-major window rows.
    # row = (di*2 + dj)*P + (i*Wo + j): a 2x2/stride-2 window is 4 rows, P apart.
    x = jnp.transpose(x_nchw, (0, 2, 3, 1))                 # (B, H, W, Cin)
    x = x.reshape(B, Ho, 2, Wo, 2, Cin)                     # (b, i, di, j, dj, c)
    x = jnp.transpose(x, (0, 2, 4, 1, 3, 5))                # (b, di, dj, i, j, c)
    x = x.reshape(B, 4 * P, Cin)

    vecs = _pack_vectors(params)

    def const(shape):
        return pl.BlockSpec(shape, lambda b: (0,) * len(shape))

    out = pl.pallas_call(
        _convproj_kernel,
        out_shape=jax.ShapeDtypeStruct((B, P, Cout), jnp.float32),
        grid_spec=pltpu.PrefetchScalarGridSpec(
            num_scalar_prefetch=0,
            grid=(B // Bt,),
            in_specs=[
                pl.BlockSpec((Bt, 4 * P, Cin), lambda b: (b, 0, 0)),  # x (Bt samples)
                const((Cin, Cout)),            # wp  (point)
                const((Cin, Cout)),            # w1  (conv1)
                const((Cout, Cout)),           # w3  (conv3)
                const((_VEC_ROWS, Cout)),      # packed taps/biases/affines
            ],
            out_specs=pl.BlockSpec((Bt, P, Cout), lambda b: (b, 0, 0)),
        ),
        compiler_params=pltpu.CompilerParams(
            dimension_semantics=("parallel",),
            vmem_limit_bytes=32 * 1024 * 1024,
        ),
    )(x, params["wp"], params["w1"], params["w3"], vecs)

    out = out.reshape(B, Ho, Wo, Cout)
    return jnp.transpose(out, (0, 3, 1, 2))                  # back to NCHW


def init_params(key, in_channel, out_channel):
    """Deterministic params in kernel-friendly layouts.
    wp/w1/w3 correspond to torch conv.weight[:, :, 0, 0].T; w2[k, c] corresponds to
    conv2.weight[c, 0, k // 2, k % 2]."""
    ks = jax.random.split(key, 12)
    r = lambda k, shape: 0.1 * jax.random.normal(k, shape, dtype=jnp.float32)
    return dict(
        wp=r(ks[0], (in_channel, out_channel)),  bp=r(ks[1], (1, out_channel)),
        w1=r(ks[2], (in_channel, out_channel)),  b1=r(ks[3], (1, out_channel)),
        g1=1.0 + r(ks[4], (1, out_channel)),     be1=r(ks[5], (1, out_channel)),
        w2=r(ks[6], (4, out_channel)),           b2=r(ks[7], (1, out_channel)),
        w3=r(ks[8], (out_channel, out_channel)), b3=r(ks[9], (1, out_channel)),
        g2=1.0 + r(ks[10], (1, out_channel)),    be2=r(ks[11], (1, out_channel)),
    )


def ref_forward(x_nchw, p):
    """Plain-JAX reference of ConvProj.forward (reverse=False)."""
    x = jnp.transpose(x_nchw, (0, 2, 3, 1))                  # (B, H, W, Cin)

    def gn(t, g, b):
        mu = t.mean(axis=(1, 2, 3), keepdims=True)
        var = ((t - mu) ** 2).mean(axis=(1, 2, 3), keepdims=True)
        return (t - mu) / jnp.sqrt(var + _EPS) * g[0] + b[0]

    # main branch
    t1 = jnp.einsum("bhwc,cd->bhwd", x, p["w1"]) + p["b1"][0]
    t1 = gn(t1, p["g1"], p["be1"])
    w2 = p["w2"]
    y = (t1[:, 0::2, 0::2, :] * w2[0]
         + t1[:, 0::2, 1::2, :] * w2[1]
         + t1[:, 1::2, 0::2, :] * w2[2]
         + t1[:, 1::2, 1::2, :] * w2[3]) + p["b2"][0]
    y = jnp.einsum("bhwc,cd->bhwd", y, p["w3"]) + p["b3"][0]
    y = gn(y, p["g2"], p["be2"])
    # shortcut
    sp = jnp.einsum("bhwc,cd->bhwd", x, p["wp"]) + p["bp"][0]
    sc = 0.25 * (sp[:, 0::2, 0::2, :] + sp[:, 0::2, 1::2, :]
                 + sp[:, 1::2, 0::2, :] + sp[:, 1::2, 1::2, :])
    return jnp.transpose(y + sc, (0, 3, 1, 2))


if __name__ == "__main__":
    key = jax.random.PRNGKey(0)
    B, Cin, H, W = 2, 4, 16, 16
    Cout = 128   # lane-dense channel count for main-branch activations / output

    kx, kp = jax.random.split(key)
    x = jax.random.normal(kx, (B, Cin, H, W), dtype=jnp.float32)
    params = init_params(kp, Cin, Cout)

    out = conv_proj_forward(x, params)
    out = jax.block_until_ready(out)

    ref = ref_forward(x, params)
    assert out.shape == (B, Cout, H // 2, W // 2)
    assert jnp.allclose(out, ref, atol=1e-3, rtol=1e-3), (
        "mismatch vs reference, max abs err = %e" % float(jnp.max(jnp.abs(out - ref))))

    print("KERNEL_OK")
</pallas_src>

<mosaic_0001>
module attributes {stable_mosaic.version = 11 : i64} {
  func.func @_convproj_kernel(%arg0: i32, %arg1: memref<1x256x4xf32, #tpu.memory_space<vmem>>, %arg2: memref<4x128xf32, #tpu.memory_space<vmem>>, %arg3: memref<4x128xf32, #tpu.memory_space<vmem>>, %arg4: memref<128x128xf32, #tpu.memory_space<vmem>>, %arg5: memref<16x128xf32, #tpu.memory_space<vmem>>, %arg6: memref<1x64x128xf32, #tpu.memory_space<vmem>>) attributes {dimension_semantics = [#tpu.dimension_semantics<parallel>], iteration_bounds = array<i64: 2>, scalar_prefetch = 0 : i64, scratch_operands = 0 : i64, tpu.core_type = #tpu.core_type<tc>, window_params = [{transform_indices = @transform_0, window_bounds = array<i64: 1, 256, 4>}, {pipeline_mode = #tpu.pipeline_mode<synchronous>, transform_indices = @transform_1, window_bounds = array<i64: 4, 128>}, {pipeline_mode = #tpu.pipeline_mode<synchronous>, transform_indices = @transform_2, window_bounds = array<i64: 4, 128>}, {pipeline_mode = #tpu.pipeline_mode<synchronous>, transform_indices = @transform_3, window_bounds = array<i64: 128, 128>}, {pipeline_mode = #tpu.pipeline_mode<synchronous>, transform_indices = @transform_4, window_bounds = array<i64: 16, 128>}, {transform_indices = @transform_5, window_bounds = array<i64: 1, 64, 128>}]} {
    %c0 = arith.constant 0 : index
    %c0_0 = arith.constant 0 : index
    %c0_1 = arith.constant 0 : index
    %0 = vector.load %arg1[%c0, %c0_0, %c0_1] : memref<1x256x4xf32, #tpu.memory_space<vmem>>, vector<1x256x4xf32>
    %c0_2 = arith.constant 0 : index
    %c0_3 = arith.constant 0 : index
    %1 = vector.load %arg5[%c0_2, %c0_3] : memref<16x128xf32, #tpu.memory_space<vmem>>, vector<4x128xf32>
    %c4 = arith.constant 4 : index
    %c0_4 = arith.constant 0 : index
    %2 = vector.load %arg5[%c4, %c0_4] : memref<16x128xf32, #tpu.memory_space<vmem>>, vector<1x128xf32>
    %c5 = arith.constant 5 : index
    %c0_5 = arith.constant 0 : index
    %3 = vector.load %arg5[%c5, %c0_5] : memref<16x128xf32, #tpu.memory_space<vmem>>, vector<1x128xf32>
    %c6 = arith.constant 6 : index
    %c0_6 = arith.constant 0 : index
    %4 = vector.load %arg5[%c6, %c0_6] : memref<16x128xf32, #tpu.memory_space<vmem>>, vector<1x128xf32>
    %c7 = arith.constant 7 : index
    %c0_7 = arith.constant 0 : index
    %5 = vector.load %arg5[%c7, %c0_7] : memref<16x128xf32, #tpu.memory_space<vmem>>, vector<1x128xf32>
    %c8 = arith.constant 8 : index
    %c0_8 = arith.constant 0 : index
    %6 = vector.load %arg5[%c8, %c0_8] : memref<16x128xf32, #tpu.memory_space<vmem>>, vector<1x128xf32>
    %c9 = arith.constant 9 : index
    %c0_9 = arith.constant 0 : index
    %7 = vector.load %arg5[%c9, %c0_9] : memref<16x128xf32, #tpu.memory_space<vmem>>, vector<1x128xf32>
    %8 = vector.shape_cast %0 : vector<1x256x4xf32> to vector<256x4xf32>
    %c0_10 = arith.constant 0 : index
    %c0_11 = arith.constant 0 : index
    %9 = vector.load %arg3[%c0_10, %c0_11] : memref<4x128xf32, #tpu.memory_space<vmem>>, vector<4x128xf32>
    %cst = arith.constant dense<0.000000e+00> : vector<256x128xf32>
    %10 = tpu.matmul %8, %9, %cst {dimension_numbers = #tpu.dot_dimension_numbers<[1], [0], [0], [1], [0, 0, 1, 1], [], []>} : vector<256x4xf32>, vector<4x128xf32>, vector<256x128xf32> -> vector<256x128xf32>
    %11 = vector.broadcast %3 : vector<1x128xf32> to vector<256x128xf32>
    %12 = arith.addf %10, %11 : vector<256x128xf32>
    %13 = vector.shape_cast %12 : vector<256x128xf32> to vector<1x256x128xf32>
    %cst_12 = arith.constant dense<0.000000e+00> : vector<1x256xf32>
    %14 = vector.multi_reduction <add>, %13, %cst_12 [2] : vector<1x256x128xf32> to vector<1x256xf32>
    %15 = vector.shape_cast %14 : vector<1x256xf32> to vector<1x256x1xf32>
    %cst_13 = arith.constant dense<0.000000e+00> : vector<1x1xf32>
    %16 = vector.multi_reduction <add>, %15, %cst_13 [1] : vector<1x256x1xf32> to vector<1x1xf32>
    %17 = vector.shape_cast %16 : vector<1x1xf32> to vector<1x1x1xf32>
    %18 = arith.mulf %13, %13 : vector<1x256x128xf32>
    %cst_14 = arith.constant dense<0.000000e+00> : vector<1x256xf32>
    %19 = vector.multi_reduction <add>, %18, %cst_14 [2] : vector<1x256x128xf32> to vector<1x256xf32>
    %20 = vector.shape_cast %19 : vector<1x256xf32> to vector<1x256x1xf32>
    %cst_15 = arith.constant dense<0.000000e+00> : vector<1x1xf32>
    %21 = vector.multi_reduction <add>, %20, %cst_15 [1] : vector<1x256x1xf32> to vector<1x1xf32>
    %22 = vector.shape_cast %21 : vector<1x1xf32> to vector<1x1x1xf32>
    %cst_16 = arith.constant 3.276800e+04 : f32
    %23 = vector.broadcast %cst_16 : f32 to vector<1x1x1xf32>
    %24 = arith.divf %17, %23 : vector<1x1x1xf32>
    %cst_17 = arith.constant 3.276800e+04 : f32
    %25 = vector.broadcast %cst_17 : f32 to vector<1x1x1xf32>
    %26 = arith.divf %22, %25 : vector<1x1x1xf32>
    %27 = arith.mulf %24, %24 : vector<1x1x1xf32>
    %28 = arith.subf %26, %27 : vector<1x1x1xf32>
    %29 = vector.broadcast %24 : vector<1x1x1xf32> to vector<1x256x128xf32>
    %30 = arith.subf %13, %29 : vector<1x256x128xf32>
    %cst_18 = arith.constant 9.99999974E-6 : f32
    %31 = vector.broadcast %cst_18 : f32 to vector<1x1x1xf32>
    %32 = arith.addf %28, %31 : vector<1x1x1xf32>
    %33 = math.rsqrt %32 : vector<1x1x1xf32>
    %34 = vector.broadcast %33 : vector<1x1x1xf32> to vector<1x256x128xf32>
    %35 = arith.mulf %30, %34 : vector<1x256x128xf32>
    %36 = vector.extract_strided_slice %35 {offsets = [0, 0, 0], sizes = [1, 64, 128], strides = [1, 1, 1]} : vector<1x256x128xf32> to vector<1x64x128xf32>
    %37 = vector.extract_strided_slice %1 {offsets = [0, 0], sizes = [1, 128], strides = [1, 1]} : vector<4x128xf32> to vector<1x128xf32>
    %38 = vector.shape_cast %37 : vector<1x128xf32> to vector<1x1x128xf32>
    %39 = vector.broadcast %38 : vector<1x1x128xf32> to vector<1x64x128xf32>
    %40 = arith.mulf %36, %39 : vector<1x64x128xf32>
    %41 = vector.extract_strided_slice %35 {offsets = [0, 64, 0], sizes = [1, 64, 128], strides = [1, 1, 1]} : vector<1x256x128xf32> to vector<1x64x128xf32>
    %42 = vector.extract_strided_slice %1 {offsets = [1, 0], sizes = [1, 128], strides = [1, 1]} : vector<4x128xf32> to vector<1x128xf32>
    %43 = vector.shape_cast %42 : vector<1x128xf32> to vector<1x1x128xf32>
    %44 = vector.broadcast %43 : vector<1x1x128xf32> to vector<1x64x128xf32>
    %45 = arith.mulf %41, %44 : vector<1x64x128xf32>
    %46 = arith.addf %40, %45 : vector<1x64x128xf32>
    %47 = vector.extract_strided_slice %35 {offsets = [0, 128, 0], sizes = [1, 64, 128], strides = [1, 1, 1]} : vector<1x256x128xf32> to vector<1x64x128xf32>
    %48 = vector.extract_strided_slice %1 {offsets = [2, 0], sizes = [1, 128], strides = [1, 1]} : vector<4x128xf32> to vector<1x128xf32>
    %49 = vector.shape_cast %48 : vector<1x128xf32> to vector<1x1x128xf32>
    %50 = vector.broadcast %49 : vector<1x1x128xf32> to vector<1x64x128xf32>
    %51 = arith.mulf %47, %50 : vector<1x64x128xf32>
    %52 = arith.addf %46, %51 : vector<1x64x128xf32>
    %53 = vector.extract_strided_slice %35 {offsets = [0, 192, 0], sizes = [1, 64, 128], strides = [1, 1, 1]} : vector<1x256x128xf32> to vector<1x64x128xf32>
    %54 = vector.extract_strided_slice %1 {offsets = [3, 0], sizes = [1, 128], strides = [1, 1]} : vector<4x128xf32> to vector<1x128xf32>
    %55 = vector.shape_cast %54 : vector<1x128xf32> to vector<1x1x128xf32>
    %56 = vector.broadcast %55 : vector<1x1x128xf32> to vector<1x64x128xf32>
    %57 = arith.mulf %53, %56 : vector<1x64x128xf32>
    %58 = arith.addf %52, %57 : vector<1x64x128xf32>
    %59 = vector.shape_cast %4 : vector<1x128xf32> to vector<1x1x128xf32>
    %60 = vector.broadcast %59 : vector<1x1x128xf32> to vector<1x64x128xf32>
    %61 = arith.addf %58, %60 : vector<1x64x128xf32>
    %62 = vector.shape_cast %61 : vector<1x64x128xf32> to vector<64x128xf32>
    %c0_19 = arith.constant 0 : index
    %c0_20 = arith.constant 0 : index
    %63 = vector.load %arg4[%c0_19, %c0_20] : memref<128x128xf32, #tpu.memory_space<vmem>>, vector<128x128xf32>
    %cst_21 = arith.constant dense<0.000000e+00> : vector<64x128xf32>
    %64 = tpu.matmul %62, %63, %cst_21 {dimension_numbers = #tpu.dot_dimension_numbers<[1], [0], [0], [1], [0, 0, 1, 1], [], []>} : vector<64x128xf32>, vector<128x128xf32>, vector<64x128xf32> -> vector<64x128xf32>
    %65 = vector.broadcast %5 : vector<1x128xf32> to vector<64x128xf32>
    %66 = arith.addf %64, %65 : vector<64x128xf32>
    %67 = vector.shape_cast %66 : vector<64x128xf32> to vector<1x64x128xf32>
    %cst_22 = arith.constant dense<0.000000e+00> : vector<1x64xf32>
    %68 = vector.multi_reduction <add>, %67, %cst_22 [2] : vector<1x64x128xf32> to vector<1x64xf32>
    %69 = vector.shape_cast %68 : vector<1x64xf32> to vector<1x64x1xf32>
    %cst_23 = arith.constant dense<0.000000e+00> : vector<1x1xf32>
    %70 = vector.multi_reduction <add>, %69, %cst_23 [1] : vector<1x64x1xf32> to vector<1x1xf32>
    %71 = vector.shape_cast %70 : vector<1x1xf32> to vector<1x1x1xf32>
    %72 = arith.mulf %67, %67 : vector<1x64x128xf32>
    %cst_24 = arith.constant dense<0.000000e+00> : vector<1x64xf32>
    %73 = vector.multi_reduction <add>, %72, %cst_24 [2] : vector<1x64x128xf32> to vector<1x64xf32>
    %74 = vector.shape_cast %73 : vector<1x64xf32> to vector<1x64x1xf32>
    %cst_25 = arith.constant dense<0.000000e+00> : vector<1x1xf32>
    %75 = vector.multi_reduction <add>, %74, %cst_25 [1] : vector<1x64x1xf32> to vector<1x1xf32>
    %76 = vector.shape_cast %75 : vector<1x1xf32> to vector<1x1x1xf32>
    %cst_26 = arith.constant 8.192000e+03 : f32
    %77 = vector.broadcast %cst_26 : f32 to vector<1x1x1xf32>
    %78 = arith.divf %71, %77 : vector<1x1x1xf32>
    %cst_27 = arith.constant 8.192000e+03 : f32
    %79 = vector.broadcast %cst_27 : f32 to vector<1x1x1xf32>
    %80 = arith.divf %76, %79 : vector<1x1x1xf32>
    %81 = arith.mulf %78, %78 : vector<1x1x1xf32>
    %82 = arith.subf %80, %81 : vector<1x1x1xf32>
    %cst_28 = arith.constant 9.99999974E-6 : f32
    %83 = vector.broadcast %cst_28 : f32 to vector<1x1x1xf32>
    %84 = arith.addf %82, %83 : vector<1x1x1xf32>
    %85 = math.rsqrt %84 : vector<1x1x1xf32>
    %86 = vector.shape_cast %6 : vector<1x128xf32> to vector<1x1x128xf32>
    %87 = vector.broadcast %85 : vector<1x1x1xf32> to vector<1x1x128xf32>
    %88 = arith.mulf %87, %86 : vector<1x1x128xf32>
    %89 = vector.broadcast %78 : vector<1x1x1xf32> to vector<1x1x128xf32>
    %90 = arith.mulf %89, %88 : vector<1x1x128xf32>
    %91 = vector.shape_cast %7 : vector<1x128xf32> to vector<1x1x128xf32>
    %92 = arith.subf %91, %90 : vector<1x1x128xf32>
    %93 = vector.extract_strided_slice %0 {offsets = [0, 0, 0], sizes = [1, 64, 4], strides = [1, 1, 1]} : vector<1x256x4xf32> to vector<1x64x4xf32>
    %94 = vector.extract_strided_slice %0 {offsets = [0, 64, 0], sizes = [1, 64, 4], strides = [1, 1, 1]} : vector<1x256x4xf32> to vector<1x64x4xf32>
    %95 = arith.addf %93, %94 : vector<1x64x4xf32>
    %96 = vector.extract_strided_slice %0 {offsets = [0, 128, 0], sizes = [1, 64, 4], strides = [1, 1, 1]} : vector<1x256x4xf32> to vector<1x64x4xf32>
    %97 = arith.addf %95, %96 : vector<1x64x4xf32>
    %98 = vector.extract_strided_slice %0 {offsets = [0, 192, 0], sizes = [1, 64, 4], strides = [1, 1, 1]} : vector<1x256x4xf32> to vector<1x64x4xf32>
    %99 = arith.addf %97, %98 : vector<1x64x4xf32>
    %cst_29 = arith.constant 2.500000e-01 : f32
    %100 = vector.broadcast %cst_29 : f32 to vector<1x64x4xf32>
    %101 = arith.mulf %100, %99 : vector<1x64x4xf32>
    %102 = vector.shape_cast %101 : vector<1x64x4xf32> to vector<64x4xf32>
    %c0_30 = arith.constant 0 : index
    %c0_31 = arith.constant 0 : index
    %103 = vector.load %arg2[%c0_30, %c0_31] : memref<4x128xf32, #tpu.memory_space<vmem>>, vector<4x128xf32>
    %cst_32 = arith.constant dense<0.000000e+00> : vector<64x128xf32>
    %104 = tpu.matmul %102, %103, %cst_32 {dimension_numbers = #tpu.dot_dimension_numbers<[1], [0], [0], [1], [0, 0, 1, 1], [], []>} : vector<64x4xf32>, vector<4x128xf32>, vector<64x128xf32> -> vector<64x128xf32>
    %105 = vector.broadcast %2 : vector<1x128xf32> to vector<64x128xf32>
    %106 = arith.addf %104, %105 : vector<64x128xf32>
    %107 = vector.shape_cast %106 : vector<64x128xf32> to vector<1x64x128xf32>
    %108 = vector.broadcast %88 : vector<1x1x128xf32> to vector<1x64x128xf32>
    %109 = arith.mulf %67, %108 : vector<1x64x128xf32>
    %110 = vector.broadcast %92 : vector<1x1x128xf32> to vector<1x64x128xf32>
    %111 = arith.addf %109, %110 : vector<1x64x128xf32>
    %112 = arith.addf %111, %107 : vector<1x64x128xf32>
    %c0_33 = arith.constant 0 : index
    %c0_34 = arith.constant 0 : index
    %c0_35 = arith.constant 0 : index
    %113 = vector.load %arg6[%c0_33, %c0_34, %c0_35] : memref<1x64x128xf32, #tpu.memory_space<vmem>>, vector<1x64x128xf32>
    tpu.vector_store %arg6[%c0_33, %c0_34, %c0_35], %112 {strides = array<i32>} : memref<1x64x128xf32, #tpu.memory_space<vmem>>, vector<1x64x128xf32>,
    return
  }
  func.func @transform_0(%arg0: i32) -> (i32, i32, i32) {
    %c0_i32 = arith.constant 0 : i32
    %c0_i32_0 = arith.constant 0 : i32
    %c0_i32_1 = arith.constant 0 : i32
    return %arg0, %c0_i32, %c0_i32_0 : i32, i32, i32
  }
  func.func @transform_1(%arg0: i32) -> (i32, i32) {
    %c0_i32 = arith.constant 0 : i32
    %c0_i32_0 = arith.constant 0 : i32
    %c0_i32_1 = arith.constant 0 : i32
    return %c0_i32, %c0_i32_0 : i32, i32
  }
  func.func @transform_2(%arg0: i32) -> (i32, i32) {
    %c0_i32 = arith.constant 0 : i32
    %c0_i32_0 = arith.constant 0 : i32
    %c0_i32_1 = arith.constant 0 : i32
    return %c0_i32, %c0_i32_0 : i32, i32
  }
  func.func @transform_3(%arg0: i32) -> (i32, i32) {
    %c0_i32 = arith.constant 0 : i32
    %c0_i32_0 = arith.constant 0 : i32
    %c0_i32_1 = arith.constant 0 : i32
    return %c0_i32, %c0_i32_0 : i32, i32
  }
  func.func @transform_4(%arg0: i32) -> (i32, i32) {
    %c0_i32 = arith.constant 0 : i32
    %c0_i32_0 = arith.constant 0 : i32
    %c0_i32_1 = arith.constant 0 : i32
    return %c0_i32, %c0_i32_0 : i32, i32
  }
  func.func @transform_5(%arg0: i32) -> (i32, i32, i32) {
    %c0_i32 = arith.constant 0 : i32
    %c0_i32_0 = arith.constant 0 : i32
    %c0_i32_1 = arith.constant 0 : i32
    return %arg0, %c0_i32, %c0_i32_0 : i32, i32, i32
  }
}

</mosaic_0001>

<llo_original>
// kernel: tpu_custom_call.1
$region0: #{tpu_custom_call.1}
  #allocation0 [shape = 'u32[]', space=smem, size = 0x4, offset = 0x4, fixed_abs, tag = 'smem constant byte address 0x4 - core index']
  #allocation1 [shape = 'u32[144,128]{1,0:T(1,128)}', space=vmem, size = 0x12000, scoped, tag = 'internal scratch']
  %s0 = inlined_call_operand.vmem [shape: f32[2,256,4], index: 0, kind: input, shape index: {}]
  %s1 = inlined_call_operand.vmem [shape: f32[4,128], index: 1, kind: input, shape index: {}]
  %s2 = inlined_call_operand.vmem [shape: f32[4,128], index: 2, kind: input, shape index: {}]
  %s3 = inlined_call_operand.vmem [shape: f32[128,128], index: 3, kind: input, shape index: {}]
  %s4 = inlined_call_operand.vmem [shape: f32[16,128], index: 4, kind: input, shape index: {}]
  %s5 = inlined_call_operand.hbm [shape: f32[2,64,128], index: 5, kind: output, shape index: {}]
  %s6 = sld [smem:[#allocation0]]
  $region53: #{tpu_custom_call.1} parent=0
    _
  %s8 = ssub.s32 1, %s6
  %s9 = scalar_select 0, %s8, %s6
  $region1: #{tpu_custom_call.1} parent=0
    #allocation2 [shape = 'u8[65536]{0}', space=vmem, size = 0x10000, scoped, tag = 'output window, operand 0']
    #allocation3 [shape = 's32[2]{0}', space=sflag, size = 0x8, scoped, tag = 'scoped memory for tpu_custom_call.1']
    %10 = vsyncpa [#allocation3], 0
    %s11 = scalar_lea.sflag [#allocation3], 1
    %12 = vsyncpa %s11, 0
    loop: start=0, step=1, limit=4
    $region2: #{tpu_custom_call.1} parent=1 // loop_pre_header
      _
    $region3: #{tpu_custom_call.1} parent=1 // loop_header
      %s14 = sphi 0, %s18
      %p15 = scmp.ge.s32.totalorder %s14, 4
      %s24 = sphi 0, %s26
      %s27 = sphi 0, %s24
      %s28 = sphi 0, %s27
      %s44 = sphi 0, %s28
      %s48 = sphi 0, %s48
      %s50 = sphi 0, %s48
      %s51 = sphi 0, %s50
      %s65 = sphi 0, %s51
      %s69 = sphi 0, %s69
      %s71 = sphi 0, %s69
      %s72 = sphi 0, %s71
      %s86 = sphi 0, %s72
      %s90 = sphi 0, %s90
      %s92 = sphi 0, %s90
      %s93 = sphi 0, %s92
      %s107 = sphi 0, %s93
      %s111 = sphi 0, %s111
      %s113 = sphi 0, %s111
      %s114 = sphi 0, %s113
      %s128 = sphi 0, %s114
      %s134 = sphi 0, %s136
      %s137 = sphi 0, %s134
      %s138 = sphi 0, %s137
      %s154 = sphi 0, %s138
    $region4: #{tpu_custom_call.1} parent=1 // loop_header_branch
      %17 = sbr.rel (%p15) target = $region8
    $region5: #{tpu_custom_call.1} parent=1 // loop_body
      %s19 = ssub.s32 %s14, 1
      %s20 = ssub.s32 %s14, 2
      %s21 = sadd.s32 %s14, 1
      %s22 = ssub.s32 %s14, %s21
      %p23 = scmp.eq.s32.totalorder %s22, 0
      %s25 = sadd.s32 %s24, 1
      %s26 = scalar_select %p23, %s24, %s25
      %p29 = pneg %p23
      %p30 = scmp.eq.s32.totalorder %s14, 1
      %p31 = por %p29, %p30
      %p32 = scmp.ne.s32.totalorder %s24, %s27
      %p33 = scmp.eq.s32.totalorder %s14, 0
      %p34 = por %p32, %p33
      %p35 = scmp.ne.s32.totalorder %s24, %s27
      %p36 = scmp.eq.s32.totalorder %s19, 1
      %p37 = por %p35, %p36
      %p38 = scmp.ne.s32.totalorder %s27, %s28
      %p39 = scmp.eq.s32.totalorder %s19, 0
      %p40 = por %p38, %p39
      %p41 = scmp.ne.s32.totalorder %s27, %s28
      %p42 = scmp.eq.s32.totalorder %s20, 1
      %p43 = por %p41, %p42
      %p45 = scmp.ne.s32.totalorder %s28, %s44
      %p46 = scmp.eq.s32.totalorder %s20, 0
      %p47 = por %p45, %p46
      %s49 = sadd.s32 %s48, 1
      %p52 = scmp.eq.s32.totalorder %s14, 1
      %p53 = scmp.ne.s32.totalorder %s48, %s50
      %p54 = scmp.eq.s32.totalorder %s14, 0
      %p55 = por %p53, %p54
      %p56 = scmp.ne.s32.totalorder %s48, %s50
      %p57 = scmp.eq.s32.totalorder %s19, 1
      %p58 = por %p56, %p57
      %p59 = scmp.ne.s32.totalorder %s50, %s51
      %p60 = scmp.eq.s32.totalorder %s19, 0
      %p61 = por %p59, %p60
      %p62 = scmp.ne.s32.totalorder %s50, %s51
      %p63 = scmp.eq.s32.totalorder %s20, 1
      %p64 = por %p62, %p63
      %p66 = scmp.ne.s32.totalorder %s51, %s65
      %p67 = scmp.eq.s32.totalorder %s20, 0
      %p68 = por %p66, %p67
      %s70 = sadd.s32 %s69, 1
      %p73 = scmp.eq.s32.totalorder %s14, 1
      %p74 = scmp.ne.s32.totalorder %s69, %s71
      %p75 = scmp.eq.s32.totalorder %s14, 0
      %p76 = por %p74, %p75
      %p77 = scmp.ne.s32.totalorder %s69, %s71
      %p78 = scmp.eq.s32.totalorder %s19, 1
      %p79 = por %p77, %p78
      %p80 = scmp.ne.s32.totalorder %s71, %s72
      %p81 = scmp.eq.s32.totalorder %s19, 0
      %p82 = por %p80, %p81
      %p83 = scmp.ne.s32.totalorder %s71, %s72
      %p84 = scmp.eq.s32.totalorder %s20, 1
      %p85 = por %p83, %p84
      %p87 = scmp.ne.s32.totalorder %s72, %s86
      %p88 = scmp.eq.s32.totalorder %s20, 0
      %p89 = por %p87, %p88
      %s91 = sadd.s32 %s90, 1
      %p94 = scmp.eq.s32.totalorder %s14, 1
      %p95 = scmp.ne.s32.totalorder %s90, %s92
      %p96 = scmp.eq.s32.totalorder %s14, 0
      %p97 = por %p95, %p96
      %p98 = scmp.ne.s32.totalorder %s90, %s92
      %p99 = scmp.eq.s32.totalorder %s19, 1
      %p100 = por %p98, %p99
      %p101 = scmp.ne.s32.totalorder %s92, %s93
      %p102 = scmp.eq.s32.totalorder %s19, 0
      %p103 = por %p101, %p102
      %p104 = scmp.ne.s32.totalorder %s92, %s93
      %p105 = scmp.eq.s32.totalorder %s20, 1
      %p106 = por %p104, %p105
      %p108 = scmp.ne.s32.totalorder %s93, %s107
      %p109 = scmp.eq.s32.totalorder %s20, 0
      %p110 = por %p108, %p109
      %s112 = sadd.s32 %s111, 1
      %p115 = scmp.eq.s32.totalorder %s14, 1
      %p116 = scmp.ne.s32.totalorder %s111, %s113
      %p117 = scmp.eq.s32.totalorder %s14, 0
      %p118 = por %p116, %p117
      %p119 = scmp.ne.s32.totalorder %s111, %s113
      %p120 = scmp.eq.s32.totalorder %s19, 1
      %p121 = por %p119, %p120
      %p122 = scmp.ne.s32.totalorder %s113, %s114
      %p123 = scmp.eq.s32.totalorder %s19, 0
      %p124 = por %p122, %p123
      %p125 = scmp.ne.s32.totalorder %s113, %s114
      %p126 = scmp.eq.s32.totalorder %s20, 1
      %p127 = por %p125, %p126
      %p129 = scmp.ne.s32.totalorder %s114, %s128
      %p130 = scmp.eq.s32.totalorder %s20, 0
      %p131 = por %p129, %p130
      %s132 = ssub.s32 %s14, %s21
      %p133 = scmp.eq.s32.totalorder %s132, 0
      %s135 = sadd.s32 %s134, 1
      %s136 = scalar_select %p133, %s134, %s135
      %p139 = pneg %p133
      %p140 = scmp.eq.s32.totalorder %s14, 1
      %p141 = por %p139, %p140
      %p142 = scmp.ne.s32.totalorder %s134, %s137
      %p143 = scmp.eq.s32.totalorder %s14, 0
      %p144 = por %p142, %p143
      %p145 = scmp.ne.s32.totalorder %s134, %s137
      %p146 = scmp.eq.s32.totalorder %s19, 1
      %p147 = por %p145, %p146
      %p148 = scmp.ne.s32.totalorder %s137, %s138
      %p149 = scmp.eq.s32.totalorder %s19, 0
      %p150 = por %p148, %p149
      %p151 = scmp.ne.s32.totalorder %s137, %s138
      %p152 = scmp.eq.s32.totalorder %s20, 1
      %p153 = por %p151, %p152
      %p155 = scmp.ne.s32.totalorder %s138, %s154
      %p156 = scmp.eq.s32.totalorder %s20, 0
      %p157 = por %p155, %p156
      %p158 = scmp.le.s32.totalorder 1, %s14
      %p159 = scmp.lt.s32.totalorder %s14, 3
      %p160 = pnand %p158, %p159
      %p161 = pneg %p160
      // Predicated region
      $region9: #{tpu_custom_call.1} parent=5 // pred_check
        _
      $region10: #{tpu_custom_call.1} parent=5 // pred_check_branch
        %163 = sbr.rel (%p160) target = $region12
      $region11: #{tpu_custom_call.1} parent=5 // pred_region
        %s164 = ssub.s32 %s14, 1
        // Predicated region
        $region13: #{tpu_custom_call.1} parent=11 // pred_check
          %p165 = pneg %p61
        $region14: #{tpu_custom_call.1} parent=11 // pred_check_branch
          %167 = sbr.rel (%p165) target = $region16
        $region15: #{tpu_custom_call.1} parent=11 // pred_region
          _
        $region16: #{tpu_custom_call.1} parent=11 // pred_fallthru
          _
        // Predicated region
        $region17: #{tpu_custom_call.1} parent=11 // pred_check
          %p168 = pneg %p82
        $region18: #{tpu_custom_call.1} parent=11 // pred_check_branch
          %170 = sbr.rel (%p168) target = $region20
        $region19: #{tpu_custom_call.1} parent=11 // pred_region
          _
        $region20: #{tpu_custom_call.1} parent=11 // pred_fallthru
          _
        // Predicated region
        $region21: #{tpu_custom_call.1} parent=11 // pred_check
          %p171 = pneg %p103
        $region22: #{tpu_custom_call.1} parent=11 // pred_check_branch
          %173 = sbr.rel (%p171) target = $region24
        $region23: #{tpu_custom_call.1} parent=11 // pred_region
          _
        $region24: #{tpu_custom_call.1} parent=11 // pred_fallthru
          _
        // Predicated region
        $region25: #{tpu_custom_call.1} parent=11 // pred_check
          %p174 = pneg %p124
        $region26: #{tpu_custom_call.1} parent=11 // pred_check_branch
          %176 = sbr.rel (%p174) target = $region28
        $region27: #{tpu_custom_call.1} parent=11 // pred_region
          _
        $region28: #{tpu_custom_call.1} parent=11 // pred_fallthru
          _
      $region12: #{tpu_custom_call.1} parent=5 // pred_fallthru
        _
      %p177 = scmp.lt.s32.totalorder %s14, 2
      // Predicated region
      $region29: #{tpu_custom_call.1} parent=5 // pred_check
        %p178 = pneg %p177
      $region30: #{tpu_custom_call.1} parent=5 // pred_check_branch
        %180 = sbr.rel (%p178) target = $region32
      $region31: #{tpu_custom_call.1} parent=5 // pred_region
        // Predicated region
        $region33: #{tpu_custom_call.1} parent=31 // pred_check
          %p181 = pneg %p34
        $region34: #{tpu_custom_call.1} parent=31 // pred_check_branch
          %183 = sbr.rel (%p181) target = $region36
        $region35: #{tpu_custom_call.1} parent=31 // pred_region
          %p184 = scmp.lt.s32.totalorder %s14, 1
          %s185 = scalar_select %p184, %s14, 1
          %s186 = smul.addr %s185, 32
          %s187 = smul.addr %s186, 8
          %s188 = scalar_lea.vmem %s0, %s187
        $region36: #{tpu_custom_call.1} parent=31 // pred_fallthru
          _
      $region32: #{tpu_custom_call.1} parent=5 // pred_fallthru
        _
      %p189 = scmp.le.s32.totalorder 1, %s14
      %p190 = scmp.lt.s32.totalorder %s14, 3
      %p191 = pnand %p189, %p190
      %p192 = pneg %p191
      // Predicated region
      $region37: #{tpu_custom_call.1} parent=5 // pred_check
        _
      $region38: #{tpu_custom_call.1} parent=5 // pred_check_branch
        %194 = sbr.rel (%p191) target = $region40
      $region39: #{tpu_custom_call.1} parent=5 // pred_region
        %s195 = ssub.s32 %s14, 1
        %p196 = scmp.lt.s32.totalorder %s19, 1
        %s197 = scalar_select %p196, %s19, 1
        %s198 = smul.addr %s197, 32
        %s199 = smul.addr %s198, 8
        %s200 = scalar_lea.vmem %s0, %s199
        %p201 = pneg %p40
        %p202 = pneg %p37
        %p203 = pneg %p61
        %p204 = pneg %p58
        %p205 = pneg %p82
        %p206 = pneg %p79
        %p207 = pneg %p103
        %p208 = pneg %p100
        %p209 = pneg %p124
        %p210 = pneg %p121
        %p211 = pneg %p150
        %p212 = pneg %p147
        %s213 = sand.u32 %s137, 1
        %s214 = scalar_lea.sflag [#allocation3], %s213
        %s215 = sand.u32 %s137, 1
        %s216 = smul.addr %s215, 64
        %s217 = scalar_lea.vmem [#allocation2], %s216
        %p218 = scmp.lt.s32.totalorder %s19, 1
        %s219 = scalar_select %p218, %s19, 1
        %s220 = smul.addr %s219, 32
        %s221 = smul.addr %s220, 8
        %s222 = scalar_lea.vmem %s0, %s221
        %v223 = vld [vmem:[%s222] sm:$0xff]
        %v224 = vld [vmem:[%s222 + $0x8] sm:$0xff]
        %v225 = vld [vmem:[%s222 + $0x10] sm:$0xff]
        %v226 = vld [vmem:[%s222 + $0x18] sm:$0xff]
        %v227 = vld [vmem:[%s222 + $0x20] sm:$0xff]
        %v228 = vld [vmem:[%s222 + $0x28] sm:$0xff]
        %v229 = vld [vmem:[%s222 + $0x30] sm:$0xff]
        %v230 = vld [vmem:[%s222 + $0x38] sm:$0xff]
        %v231 = vld [vmem:[%s222 + $0x40] sm:$0xff]
        %v232 = vld [vmem:[%s222 + $0x48] sm:$0xff]
        %v233 = vld [vmem:[%s222 + $0x50] sm:$0xff]
        %v234 = vld [vmem:[%s222 + $0x58] sm:$0xff]
        %v235 = vld [vmem:[%s222 + $0x60] sm:$0xff]
        %v236 = vld [vmem:[%s222 + $0x68] sm:$0xff]
        %v237 = vld [vmem:[%s222 + $0x70] sm:$0xff]
        %v238 = vld [vmem:[%s222 + $0x78] sm:$0xff]
        %v239 = vld [vmem:[%s222 + $0x80] sm:$0xff]
        %v240 = vld [vmem:[%s222 + $0x88] sm:$0xff]
        %v241 = vld [vmem:[%s222 + $0x90] sm:$0xff]
        %v242 = vld [vmem:[%s222 + $0x98] sm:$0xff]
        %v243 = vld [vmem:[%s222 + $0xa0] sm:$0xff]
        %v244 = vld [vmem:[%s222 + $0xa8] sm:$0xff]
        %v245 = vld [vmem:[%s222 + $0xb0] sm:$0xff]
        %v246 = vld [vmem:[%s222 + $0xb8] sm:$0xff]
        %v247 = vld [vmem:[%s222 + $0xc0] sm:$0xff]
        %v248 = vld [vmem:[%s222 + $0xc8] sm:$0xff]
        %v249 = vld [vmem:[%s222 + $0xd0] sm:$0xff]
        %v250 = vld [vmem:[%s222 + $0xd8] sm:$0xff]
        %v251 = vld [vmem:[%s222 + $0xe0] sm:$0xff]
        %v252 = vld [vmem:[%s222 + $0xe8] sm:$0xff]
        %v253 = vld [vmem:[%s222 + $0xf0] sm:$0xff]
        %v254 = vld [vmem:[%s222 + $0xf8] sm:$0xff]
        %v255 = vld [vmem:[%s4] sm:$0xf]
        %v256 = vld [vmem:[%s4 + $0x4] sm:$0x1]
        %v257 = vld [vmem:[%s4 + $0x5] sm:$0x1]
        %v258 = vld [vmem:[%s4 + $0x6] sm:$0x1]
        %v259 = vld [vmem:[%s4 + $0x7] sm:$0x1]
        %v260 = vld [vmem:[%s4 + $0x8] sm:$0x1]
        %v261 = vld [vmem:[%s4 + $0x9] sm:$0x1]
        %v262 = vld [vmem:[%s2] sm:$0xf]
        %v263 = vlaneseq
        %v264 = vshrl.u32 %v263, 7
        %v265 = vsub.s32 0, %v264
        %v266 = vrot.slane %v257, %v265
        %vm267 = vcmask 31744
        %v269 = vsel %vm267, %v223, 0
        %v272 = vsel %vm267, %v224, 0
        %v275 = vsel %vm267, %v225, 0
        %v278 = vsel %vm267, %v226, 0
        %v281 = vsel %vm267, %v227, 0
        %v284 = vsel %vm267, %v228, 0
        %v287 = vsel %vm267, %v229, 0
        %v290 = vsel %vm267, %v230, 0
        %v293 = vsel %vm267, %v231, 0
        %v296 = vsel %vm267, %v232, 0
        %v299 = vsel %vm267, %v233, 0
        %v302 = vsel %vm267, %v234, 0
        %v305 = vsel %vm267, %v235, 0
        %v308 = vsel %vm267, %v236, 0
        %v311 = vsel %vm267, %v237, 0
        %v314 = vsel %vm267, %v238, 0
        %v317 = vsel %vm267, %v239, 0
        %v320 = vsel %vm267, %v240, 0
        %v323 = vsel %vm267, %v241, 0
        %v326 = vsel %vm267, %v242, 0
        %v329 = vsel %vm267, %v243, 0
        %v332 = vsel %vm267, %v244, 0
        %v335 = vsel %vm267, %v245, 0
        %v338 = vsel %vm267, %v246, 0
        %v341 = vsel %vm267, %v247, 0
        %v344 = vsel %vm267, %v248, 0
        %v347 = vsel %vm267, %v249, 0
        %v350 = vsel %vm267, %v250, 0
        %v353 = vsel %vm267, %v251, 0
        %v356 = vsel %vm267, %v252, 0
        %v359 = vsel %vm267, %v253, 0
        %v362 = vsel %vm267, %v254, 0
        %vm364 = vcmask 1043456
        %v366 = vsel %vm364, %v262, 0
        %368 = vmatprep.subr.mxu0 0.0
        %369 = vmatpush1.msra.mxu0 0.0
        %370 = vmatprep.subr.mxu0 0.0
        %371 = vmatpush1.msra.mxu0 0.0
        %372 = vmatprep.subr.mxu0 0.0
        %373 = vmatpush1.msra.mxu0 0.0
        %374 = vmatprep.subr.mxu0 0.0
        %375 = vmatpush1.msra.mxu0 0.0
        %376 = vmatprep.subr.mxu0 0.0
        %377 = vmatpush1.msra.mxu0 0.0
        %378 = vmatprep.subr.mxu0 0.0
        %379 = vmatpush1.msra.mxu0 0.0
        %380 = vmatprep.subr.mxu0 0.0
        %381 = vmatpush1.msra.mxu0 0.0
        %382 = vmatprep.subr.mxu0 0.0
        %383 = vmatpush1.msra.mxu0 0.0
        %384 = vmatprep.subr.mxu0 0.0
        %385 = vmatpush1.msra.mxu0 0.0
        %386 = vmatprep.subr.mxu0 0.0
        %387 = vmatpush1.msra.mxu0 0.0
        %388 = vmatprep.subr.mxu0 0.0
        %389 = vmatpush1.msra.mxu0 0.0
        %390 = vmatprep.subr.mxu0 0.0
        %391 = vmatpush1.msra.mxu0 0.0
        %392 = vmatprep.subr.mxu0 0.0
        %393 = vmatpush1.msra.mxu0 0.0
        %394 = vmatprep.subr.mxu0 0.0
        %395 = vmatpush1.msra.mxu0 0.0
        %396 = vmatprep.subr.mxu0 0.0
        %397 = vmatpush1.msra.mxu0 0.0
        %398 = vmatprep.subr.mxu0 0.0
        %399 = vmatpush1.msra.mxu0 %v366
        %400 = vmatprep.subr.mxu0 0.0
        %401 = vmatpush2.msra.mxu0 0.0
        %402 = vmatprep.subr.mxu0 0.0
        %403 = vmatpush2.msra.mxu0 0.0
        %404 = vmatprep.subr.mxu0 0.0
        %405 = vmatpush2.msra.mxu0 0.0
        %406 = vmatprep.subr.mxu0 0.0
        %407 = vmatpush2.msra.mxu0 0.0
        %408 = vmatprep.subr.mxu0 0.0
        %409 = vmatpush2.msra.mxu0 0.0
        %410 = vmatprep.subr.mxu0 0.0
        %411 = vmatpush2.msra.mxu0 0.0
        %412 = vmatprep.subr.mxu0 0.0
        %413 = vmatpush2.msra.mxu0 0.0
        %414 = vmatprep.subr.mxu0 0.0
        %415 = vmatpush2.msra.mxu0 0.0
        %416 = vmatprep.subr.mxu0 0.0
        %417 = vmatpush2.msra.mxu0 0.0
        %418 = vmatprep.subr.mxu0 0.0
        %419 = vmatpush2.msra.mxu0 0.0
        %420 = vmatprep.subr.mxu0 0.0
        %421 = vmatpush2.msra.mxu0 0.0
        %422 = vmatprep.subr.mxu0 0.0
        %423 = vmatpush2.msra.mxu0 0.0
        %424 = vmatprep.subr.mxu0 0.0
        %425 = vmatpush2.msra.mxu0 0.0
        %426 = vmatprep.subr.mxu0 0.0
        %427 = vmatpush2.msra.mxu0 0.0
        %428 = vmatprep.subr.mxu0 0.0
        %429 = vmatpush2.msra.mxu0 0.0
        %430 = vmatprep.subr.mxu0 0.0
        %431 = vmatpush2.msra.mxu0 0.0
        %432 = vmatprep.mubr.f32.mxu0 0.0
        %433 = vmatmul.mubr.f32.gmra.mxu0 %v269
        %v434 = vpop.f32.mrf.mxu0
        %v435 = vadd.f32 %v266, %v434
        %v436 = vpop.f32.mrf.mxu0
        %437 = vmatprep.mubr.f32.mxu0 0.0
        %438 = vmatmul.mubr.f32.gmra.mxu0 %v272
        %v439 = vpop.f32.mrf.mxu0
        %v440 = vadd.f32 %v266, %v439
        %v441 = vpop.f32.mrf.mxu0
        %442 = vmatprep.mubr.f32.mxu0 0.0
        %443 = vmatmul.mubr.f32.gmra.mxu0 %v275
        %v444 = vpop.f32.mrf.mxu0
        %v445 = vadd.f32 %v266, %v444
        %v446 = vpop.f32.mrf.mxu0
        %447 = vmatprep.mubr.f32.mxu0 0.0
        %448 = vmatmul.mubr.f32.gmra.mxu0 %v278
        %v449 = vpop.f32.mrf.mxu0
        %v450 = vadd.f32 %v266, %v449
        %v451 = vpop.f32.mrf.mxu0
        %452 = vmatprep.mubr.f32.mxu0 0.0
        %453 = vmatmul.mubr.f32.gmra.mxu0 %v281
        %v454 = vpop.f32.mrf.mxu0
        %v455 = vadd.f32 %v266, %v454
        %v456 = vpop.f32.mrf.mxu0
        %457 = vmatprep.mubr.f32.mxu0 0.0
        %458 = vmatmul.mubr.f32.gmra.mxu0 %v284
        %v459 = vpop.f32.mrf.mxu0
        %v460 = vadd.f32 %v266, %v459
        %v461 = vpop.f32.mrf.mxu0
        %462 = vmatprep.mubr.f32.mxu0 0.0
        %463 = vmatmul.mubr.f32.gmra.mxu0 %v287
        %v464 = vpop.f32.mrf.mxu0
        %v465 = vadd.f32 %v266, %v464
        %v466 = vpop.f32.mrf.mxu0
        %467 = vmatprep.mubr.f32.mxu0 0.0
        %468 = vmatmul.mubr.f32.gmra.mxu0 %v290
        %v469 = vpop.f32.mrf.mxu0
        %v470 = vadd.f32 %v266, %v469
        %v471 = vpop.f32.mrf.mxu0
        %472 = vmatprep.mubr.f32.mxu0 0.0
        %473 = vmatmul.mubr.f32.gmra.mxu0 %v293
        %v474 = vpop.f32.mrf.mxu0
        %v475 = vadd.f32 %v266, %v474
        %v476 = vpop.f32.mrf.mxu0
        %477 = vmatprep.mubr.f32.mxu0 0.0
        %478 = vmatmul.mubr.f32.gmra.mxu0 %v296
        %v479 = vpop.f32.mrf.mxu0
        %v480 = vadd.f32 %v266, %v479
        %v481 = vpop.f32.mrf.mxu0
        %482 = vmatprep.mubr.f32.mxu0 0.0
        %483 = vmatmul.mubr.f32.gmra.mxu0 %v299
        %v484 = vpop.f32.mrf.mxu0
        %v485 = vadd.f32 %v266, %v484
        %v486 = vpop.f32.mrf.mxu0
        %487 = vmatprep.mubr.f32.mxu0 0.0
        %488 = vmatmul.mubr.f32.gmra.mxu0 %v302
        %v489 = vpop.f32.mrf.mxu0
        %v490 = vadd.f32 %v266, %v489
        %v491 = vpop.f32.mrf.mxu0
        %492 = vmatprep.mubr.f32.mxu0 0.0
        %493 = vmatmul.mubr.f32.gmra.mxu0 %v305
        %v494 = vpop.f32.mrf.mxu0
        %v495 = vadd.f32 %v266, %v494
        %v496 = vpop.f32.mrf.mxu0
        %497 = vmatprep.mubr.f32.mxu0 0.0
        %498 = vmatmul.mubr.f32.gmra.mxu0 %v308
        %v499 = vpop.f32.mrf.mxu0
        %v500 = vadd.f32 %v266, %v499
        %v501 = vpop.f32.mrf.mxu0
        %502 = vmatprep.mubr.f32.mxu0 0.0
        %503 = vmatmul.mubr.f32.gmra.mxu0 %v311
        %v504 = vpop.f32.mrf.mxu0
        %v505 = vadd.f32 %v266, %v504
        %v506 = vpop.f32.mrf.mxu0
        %507 = vmatprep.mubr.f32.mxu0 0.0
        %508 = vmatmul.mubr.f32.gmra.mxu0 %v314
        %v509 = vpop.f32.mrf.mxu0
        %v510 = vadd.f32 %v266, %v509
        %v511 = vpop.f32.mrf.mxu0
        %512 = vmatprep.mubr.f32.mxu0 0.0
        %513 = vmatmul.mubr.f32.gmra.mxu0 %v317
        %v514 = vpop.f32.mrf.mxu0
        %v515 = vadd.f32 %v266, %v514
        %v516 = vpop.f32.mrf.mxu0
        %517 = vmatprep.mubr.f32.mxu0 0.0
        %518 = vmatmul.mubr.f32.gmra.mxu0 %v320
        %v519 = vpop.f32.mrf.mxu0
        %v520 = vadd.f32 %v266, %v519
        %v521 = vpop.f32.mrf.mxu0
        %522 = vmatprep.mubr.f32.mxu0 0.0
        %523 = vmatmul.mubr.f32.gmra.mxu0 %v323
        %v524 = vpop.f32.mrf.mxu0
        %v525 = vadd.f32 %v266, %v524
        %v526 = vpop.f32.mrf.mxu0
        %527 = vmatprep.mubr.f32.mxu0 0.0
        %528 = vmatmul.mubr.f32.gmra.mxu0 %v326
        %v529 = vpop.f32.mrf.mxu0
        %v530 = vadd.f32 %v266, %v529
        %v531 = vpop.f32.mrf.mxu0
        %532 = vmatprep.mubr.f32.mxu0 0.0
        %533 = vmatmul.mubr.f32.gmra.mxu0 %v329
        %v534 = vpop.f32.mrf.mxu0
        %v535 = vadd.f32 %v266, %v534
        %v536 = vpop.f32.mrf.mxu0
        %537 = vmatprep.mubr.f32.mxu0 0.0
        %538 = vmatmul.mubr.f32.gmra.mxu0 %v332
        %v539 = vpop.f32.mrf.mxu0
        %v540 = vadd.f32 %v266, %v539
        %v541 = vpop.f32.mrf.mxu0
        %542 = vmatprep.mubr.f32.mxu0 0.0
        %543 = vmatmul.mubr.f32.gmra.mxu0 %v335
        %v544 = vpop.f32.mrf.mxu0
        %v545 = vadd.f32 %v266, %v544
        %v546 = vpop.f32.mrf.mxu0
        %547 = vmatprep.mubr.f32.mxu0 0.0
        %548 = vmatmul.mubr.f32.gmra.mxu0 %v338
        %v549 = vpop.f32.mrf.mxu0
        %v550 = vadd.f32 %v266, %v549
        %v551 = vpop.f32.mrf.mxu0
        %552 = vmatprep.mubr.f32.mxu0 0.0
        %553 = vmatmul.mubr.f32.gmra.mxu0 %v341
        %v554 = vpop.f32.mrf.mxu0
        %v555 = vadd.f32 %v266, %v554
        %v556 = vpop.f32.mrf.mxu0
        %557 = vmatprep.mubr.f32.mxu0 0.0
        %558 = vmatmul.mubr.f32.gmra.mxu0 %v344
        %v559 = vpop.f32.mrf.mxu0
        %v560 = vadd.f32 %v266, %v559
        %v561 = vpop.f32.mrf.mxu0
        %562 = vmatprep.mubr.f32.mxu0 0.0
        %563 = vmatmul.mubr.f32.gmra.mxu0 %v347
        %v564 = vpop.f32.mrf.mxu0
        %v565 = vadd.f32 %v266, %v564
        %v566 = vpop.f32.mrf.mxu0
        %567 = vmatprep.mubr.f32.mxu0 0.0
        %568 = vmatmul.mubr.f32.gmra.mxu0 %v350
        %v569 = vpop.f32.mrf.mxu0
        %v570 = vadd.f32 %v266, %v569
        %v571 = vpop.f32.mrf.mxu0
        %572 = vmatprep.mubr.f32.mxu0 0.0
        %573 = vmatmul.mubr.f32.gmra.mxu0 %v353
        %v574 = vpop.f32.mrf.mxu0
        %v575 = vadd.f32 %v266, %v574
        %v576 = vpop.f32.mrf.mxu0
        %577 = vmatprep.mubr.f32.mxu0 0.0
        %578 = vmatmul.mubr.f32.gmra.mxu0 %v356
        %v579 = vpop.f32.mrf.mxu0
        %v580 = vadd.f32 %v266, %v579
        %v581 = vpop.f32.mrf.mxu0
        %582 = vmatprep.mubr.f32.mxu0 0.0
        %583 = vmatmul.mubr.f32.gmra.mxu0 %v359
        %v584 = vpop.f32.mrf.mxu0
        %v585 = vadd.f32 %v266, %v584
        %v586 = vpop.f32.mrf.mxu0
        %587 = vmatprep.mubr.f32.mxu0 0.0
        %588 = vmatmul.mubr.f32.gmra.mxu0 %v362
        %v589 = vpop.f32.mrf.mxu0
        %v590 = vadd.f32 %v266, %v589
        %v591 = vpop.f32.mrf.mxu0
        %592 = vdwg.mxu0
        %593 = vadd.xlane.f32.xlu0 %v435
        %v594 = vpop.xlane.xlu0 %593
        %595 = vadd.xlane.f32.xlu0 %v440
        %v596 = vpop.xlane.xlu0 %595
        %597 = vadd.xlane.f32.xlu0 %v445
        %v598 = vpop.xlane.xlu0 %597
        %599 = vadd.xlane.f32.xlu0 %v450
        %v600 = vpop.xlane.xlu0 %599
        %601 = vadd.xlane.f32.xlu0 %v455
        %v602 = vpop.xlane.xlu0 %601
        %603 = vadd.xlane.f32.xlu0 %v460
        %v604 = vpop.xlane.xlu0 %603
        %605 = vadd.xlane.f32.xlu0 %v465
        %v606 = vpop.xlane.xlu0 %605
        %607 = vadd.xlane.f32.xlu0 %v470
        %v608 = vpop.xlane.xlu0 %607
        %609 = vadd.xlane.f32.xlu0 %v475
        %v610 = vpop.xlane.xlu0 %609
        %611 = vadd.xlane.f32.xlu0 %v480
        %v612 = vpop.xlane.xlu0 %611
        %613 = vadd.xlane.f32.xlu0 %v485
        %v614 = vpop.xlane.xlu0 %613
        %615 = vadd.xlane.f32.xlu0 %v490
        %v616 = vpop.xlane.xlu0 %615
        %617 = vadd.xlane.f32.xlu0 %v495
        %v618 = vpop.xlane.xlu0 %617
        %619 = vadd.xlane.f32.xlu0 %v500
        %v620 = vpop.xlane.xlu0 %619
        %621 = vadd.xlane.f32.xlu0 %v505
        %v622 = vpop.xlane.xlu0 %621
        %623 = vadd.xlane.f32.xlu0 %v510
        %v624 = vpop.xlane.xlu0 %623
        %625 = vadd.xlane.f32.xlu0 %v515
        %v626 = vpop.xlane.xlu0 %625
        %627 = vadd.xlane.f32.xlu0 %v520
        %v628 = vpop.xlane.xlu0 %627
        %629 = vadd.xlane.f32.xlu0 %v525
        %v630 = vpop.xlane.xlu0 %629
        %631 = vadd.xlane.f32.xlu0 %v530
        %v632 = vpop.xlane.xlu0 %631
        %633 = vadd.xlane.f32.xlu0 %v535
        %v634 = vpop.xlane.xlu0 %633
        %635 = vadd.xlane.f32.xlu0 %v540
        %v636 = vpop.xlane.xlu0 %635
        %637 = vadd.xlane.f32.xlu0 %v545
        %v638 = vpop.xlane.xlu0 %637
        %639 = vadd.xlane.f32.xlu0 %v550
        %v640 = vpop.xlane.xlu0 %639
        %641 = vadd.xlane.f32.xlu0 %v555
        %v642 = vpop.xlane.xlu0 %641
        %643 = vadd.xlane.f32.xlu0 %v560
        %v644 = vpop.xlane.xlu0 %643
        %645 = vadd.xlane.f32.xlu0 %v565
        %v646 = vpop.xlane.xlu0 %645
        %647 = vadd.xlane.f32.xlu0 %v570
        %v648 = vpop.xlane.xlu0 %647
        %649 = vadd.xlane.f32.xlu0 %v575
        %v650 = vpop.xlane.xlu0 %649
        %651 = vadd.xlane.f32.xlu0 %v580
        %v652 = vpop.xlane.xlu0 %651
        %653 = vadd.xlane.f32.xlu0 %v585
        %v654 = vpop.xlane.xlu0 %653
        %655 = vadd.xlane.f32.xlu0 %v590
        %v656 = vpop.xlane.xlu0 %655
        %v657 = vadd.f32 %v594, %v596
        %v658 = vadd.f32 %v657, %v598
        %v659 = vadd.f32 %v658, %v600
        %v660 = vadd.f32 %v659, %v602
        %v661 = vadd.f32 %v660, %v604
        %v662 = vadd.f32 %v661, %v606
        %v663 = vadd.f32 %v662, %v608
        %v664 = vadd.f32 %v663, %v610
        %v665 = vadd.f32 %v664, %v612
        %v666 = vadd.f32 %v665, %v614
        %v667 = vadd.f32 %v666, %v616
        %v668 = vadd.f32 %v667, %v618
        %v669 = vadd.f32 %v668, %v620
        %v670 = vadd.f32 %v669, %v622
        %v671 = vadd.f32 %v670, %v624
        %v672 = vadd.f32 %v671, %v626
        %v673 = vadd.f32 %v672, %v628
        %v674 = vadd.f32 %v673, %v630
        %v675 = vadd.f32 %v674, %v632
        %v676 = vadd.f32 %v675, %v634
        %v677 = vadd.f32 %v676, %v636
        %v678 = vadd.f32 %v677, %v638
        %v679 = vadd.f32 %v678, %v640
        %v680 = vadd.f32 %v679, %v642
        %v681 = vadd.f32 %v680, %v644
        %v682 = vadd.f32 %v681, %v646
        %v683 = vadd.f32 %v682, %v648
        %v684 = vadd.f32 %v683, %v650
        %v685 = vadd.f32 %v684, %v652
        %v686 = vadd.f32 %v685, %v654
        %v687 = vadd.f32 %v686, %v656
        %v688 = vrot.slane %v687, 4
        %v689 = vadd.f32 %v687, %v688
        %v690 = vrot.slane %v689, 2
        %v691 = vadd.f32 %v689, %v690
        %v692 = vrot.slane %v691, 1
        %v693 = vadd.f32 %v691, %v692
        %v694 = vmul.f32 %v435, %v435
        %v695 = vmul.f32 %v440, %v440
        %v696 = vmul.f32 %v445, %v445
        %v697 = vmul.f32 %v450, %v450
        %v698 = vmul.f32 %v455, %v455
        %v699 = vmul.f32 %v460, %v460
        %v700 = vmul.f32 %v465, %v465
        %v701 = vmul.f32 %v470, %v470
        %v702 = vmul.f32 %v475, %v475
        %v703 = vmul.f32 %v480, %v480
        %v704 = vmul.f32 %v485, %v485
        %v705 = vmul.f32 %v490, %v490
        %v706 = vmul.f32 %v495, %v495
        %v707 = vmul.f32 %v500, %v500
        %v708 = vmul.f32 %v505, %v505
        %v709 = vmul.f32 %v510, %v510
        %v710 = vmul.f32 %v515, %v515
        %v711 = vmul.f32 %v520, %v520
        %v712 = vmul.f32 %v525, %v525
        %v713 = vmul.f32 %v530, %v530
        %v714 = vmul.f32 %v535, %v535
        %v715 = vmul.f32 %v540, %v540
        %v716 = vmul.f32 %v545, %v545
        %v717 = vmul.f32 %v550, %v550
        %v718 = vmul.f32 %v555, %v555
        %v719 = vmul.f32 %v560, %v560
        %v720 = vmul.f32 %v565, %v565
        %v721 = vmul.f32 %v570, %v570
        %v722 = vmul.f32 %v575, %v575
        %v723 = vmul.f32 %v580, %v580
        %v724 = vmul.f32 %v585, %v585
        %v725 = vmul.f32 %v590, %v590
        %726 = vadd.xlane.f32.xlu0 %v694
        %v727 = vpop.xlane.xlu0 %726
        %728 = vadd.xlane.f32.xlu0 %v695
        %v729 = vpop.xlane.xlu0 %728
        %730 = vadd.xlane.f32.xlu0 %v696
        %v731 = vpop.xlane.xlu0 %730
        %732 = vadd.xlane.f32.xlu0 %v697
        %v733 = vpop.xlane.xlu0 %732
        %734 = vadd.xlane.f32.xlu0 %v698
        %v735 = vpop.xlane.xlu0 %734
        %736 = vadd.xlane.f32.xlu0 %v699
        %v737 = vpop.xlane.xlu0 %736
        %738 = vadd.xlane.f32.xlu0 %v700
        %v739 = vpop.xlane.xlu0 %738
        %740 = vadd.xlane.f32.xlu0 %v701
        %v741 = vpop.xlane.xlu0 %740
        %742 = vadd.xlane.f32.xlu0 %v702
        %v743 = vpop.xlane.xlu0 %742
        %744 = vadd.xlane.f32.xlu0 %v703
        %v745 = vpop.xlane.xlu0 %744
        %746 = vadd.xlane.f32.xlu0 %v704
        %v747 = vpop.xlane.xlu0 %746
        %748 = vadd.xlane.f32.xlu0 %v705
        %v749 = vpop.xlane.xlu0 %748
        %750 = vadd.xlane.f32.xlu0 %v706
        %v751 = vpop.xlane.xlu0 %750
        %752 = vadd.xlane.f32.xlu0 %v707
        %v753 = vpop.xlane.xlu0 %752
        %754 = vadd.xlane.f32.xlu0 %v708
        %v755 = vpop.xlane.xlu0 %754
        %756 = vadd.xlane.f32.xlu0 %v709
        %v757 = vpop.xlane.xlu0 %756
        %758 = vadd.xlane.f32.xlu0 %v710
        %v759 = vpop.xlane.xlu0 %758
        %760 = vadd.xlane.f32.xlu0 %v711
        %v761 = vpop.xlane.xlu0 %760
        %762 = vadd.xlane.f32.xlu0 %v712
        %v763 = vpop.xlane.xlu0 %762
        %764 = vadd.xlane.f32.xlu0 %v713
        %v765 = vpop.xlane.xlu0 %764
        %766 = vadd.xlane.f32.xlu0 %v714
        %v767 = vpop.xlane.xlu0 %766
        %768 = vadd.xlane.f32.xlu0 %v715
        %v769 = vpop.xlane.xlu0 %768
        %770 = vadd.xlane.f32.xlu0 %v716
        %v771 = vpop.xlane.xlu0 %770
        %772 = vadd.xlane.f32.xlu0 %v717
        %v773 = vpop.xlane.xlu0 %772
        %774 = vadd.xlane.f32.xlu0 %v718
        %v775 = vpop.xlane.xlu0 %774
        %776 = vadd.xlane.f32.xlu0 %v719
        %v777 = vpop.xlane.xlu0 %776
        %778 = vadd.xlane.f32.xlu0 %v720
        %v779 = vpop.xlane.xlu0 %778
        %780 = vadd.xlane.f32.xlu0 %v721
        %v781 = vpop.xlane.xlu0 %780
        %782 = vadd.xlane.f32.xlu0 %v722
        %v783 = vpop.xlane.xlu0 %782
        %784 = vadd.xlane.f32.xlu0 %v723
        %v785 = vpop.xlane.xlu0 %784
        %786 = vadd.xlane.f32.xlu0 %v724
        %v787 = vpop.xlane.xlu0 %786
        %788 = vadd.xlane.f32.xlu0 %v725
        %v789 = vpop.xlane.xlu0 %788
        %v790 = vadd.f32 %v727, %v729
        %v791 = vadd.f32 %v790, %v731
        %v792 = vadd.f32 %v791, %v733
        %v793 = vadd.f32 %v792, %v735
        %v794 = vadd.f32 %v793, %v737
        %v795 = vadd.f32 %v794, %v739
        %v796 = vadd.f32 %v795, %v741
        %v797 = vadd.f32 %v796, %v743
        %v798 = vadd.f32 %v797, %v745
        %v799 = vadd.f32 %v798, %v747
        %v800 = vadd.f32 %v799, %v749
        %v801 = vadd.f32 %v800, %v751
        %v802 = vadd.f32 %v801, %v753
        %v803 = vadd.f32 %v802, %v755
        %v804 = vadd.f32 %v803, %v757
        %v805 = vadd.f32 %v804, %v759
        %v806 = vadd.f32 %v805, %v761
        %v807 = vadd.f32 %v806, %v763
        %v808 = vadd.f32 %v807, %v765
        %v809 = vadd.f32 %v808, %v767
        %v810 = vadd.f32 %v809, %v769
        %v811 = vadd.f32 %v810, %v771
        %v812 = vadd.f32 %v811, %v773
        %v813 = vadd.f32 %v812, %v775
        %v814 = vadd.f32 %v813, %v777
        %v815 = vadd.f32 %v814, %v779
        %v816 = vadd.f32 %v815, %v781
        %v817 = vadd.f32 %v816, %v783
        %v818 = vadd.f32 %v817, %v785
        %v819 = vadd.f32 %v818, %v787
        %v820 = vadd.f32 %v819, %v789
        %v821 = vrot.slane %v820, 4
        %v822 = vadd.f32 %v820, %v821
        %v823 = vrot.slane %v822, 2
        %v824 = vadd.f32 %v822, %v823
        %v825 = vrot.slane %v824, 1
        %v826 = vadd.f32 %v824, %v825
        %v827 = vrcp.pop 32768.0
        %v828 = vmul.f32 %v693, %v827
        %v829 = vmul.f32 %v826, %v827
        %v830 = vmul.f32 %v828, %v828
        %v831 = vsub.f32 %v829, %v830
        %v832 = vsub.f32 %v435, %v828
        %v833 = vsub.f32 %v440, %v828
        %v834 = vsub.f32 %v445, %v828
        %v835 = vsub.f32 %v450, %v828
        %v836 = vsub.f32 %v455, %v828
        %v837 = vsub.f32 %v460, %v828
        %v838 = vsub.f32 %v465, %v828
        %v839 = vsub.f32 %v470, %v828
        %v840 = vsub.f32 %v475, %v828
        %v841 = vsub.f32 %v480, %v828
        %v842 = vsub.f32 %v485, %v828
        %v843 = vsub.f32 %v490, %v828
        %v844 = vsub.f32 %v495, %v828
        %v845 = vsub.f32 %v500, %v828
        %v846 = vsub.f32 %v505, %v828
        %v847 = vsub.f32 %v510, %v828
        %v848 = vsub.f32 %v515, %v828
        %v849 = vsub.f32 %v520, %v828
        %v850 = vsub.f32 %v525, %v828
        %v851 = vsub.f32 %v530, %v828
        %v852 = vsub.f32 %v535, %v828
        %v853 = vsub.f32 %v540, %v828
        %v854 = vsub.f32 %v545, %v828
        %v855 = vsub.f32 %v550, %v828
        %v856 = vsub.f32 %v555, %v828
        %v857 = vsub.f32 %v560, %v828
        %v858 = vsub.f32 %v565, %v828
        %v859 = vsub.f32 %v570, %v828
        %v860 = vsub.f32 %v575, %v828
        %v861 = vsub.f32 %v580, %v828
        %v862 = vsub.f32 %v585, %v828
        %v863 = vsub.f32 %v590, %v828
        %v864 = vadd.f32 %v831, 1e-05
        %v865 = vrsqrt.pop %v864
        %v866 = vmul.f32 %v832, %v865
        %v867 = vmul.f32 %v833, %v865
        %v868 = vmul.f32 %v834, %v865
        %v869 = vmul.f32 %v835, %v865
        %v870 = vmul.f32 %v836, %v865
        %v871 = vmul.f32 %v837, %v865
        %v872 = vmul.f32 %v838, %v865
        %v873 = vmul.f32 %v839, %v865
        %v874 = vmul.f32 %v840, %v865
        %v875 = vmul.f32 %v841, %v865
        %v876 = vmul.f32 %v842, %v865
        %v877 = vmul.f32 %v843, %v865
        %v878 = vmul.f32 %v844, %v865
        %v879 = vmul.f32 %v845, %v865
        %v880 = vmul.f32 %v846, %v865
        %v881 = vmul.f32 %v847, %v865
        %v882 = vmul.f32 %v848, %v865
        %v883 = vmul.f32 %v849, %v865
        %v884 = vmul.f32 %v850, %v865
        %v885 = vmul.f32 %v851, %v865
        %v886 = vmul.f32 %v852, %v865
        %v887 = vmul.f32 %v853, %v865
        %v888 = vmul.f32 %v854, %v865
        %v889 = vmul.f32 %v855, %v865
        %v890 = vmul.f32 %v856, %v865
        %v891 = vmul.f32 %v857, %v865
        %v892 = vmul.f32 %v858, %v865
        %v893 = vmul.f32 %v859, %v865
        %v894 = vmul.f32 %v860, %v865
        %v895 = vmul.f32 %v861, %v865
        %v896 = vmul.f32 %v862, %v865
        %v897 = vmul.f32 %v863, %v865
        %v898 = vlaneseq
        %v899 = vshrl.u32 %v898, 7
        %v900 = vsub.s32 0, %v899
        %v901 = vrot.slane %v255, %v900
        %v902 = vmul.f32 %v866, %v901
        %v903 = vmul.f32 %v867, %v901
        %v904 = vmul.f32 %v868, %v901
        %v905 = vmul.f32 %v869, %v901
        %v906 = vmul.f32 %v870, %v901
        %v907 = vmul.f32 %v871, %v901
        %v908 = vmul.f32 %v872, %v901
        %v909 = vmul.f32 %v873, %v901
        %v910 = vlaneseq
        %v911 = vshrl.u32 %v910, 7
        %v912 = vsub.s32 1, %v911
        %v913 = vrot.slane %v255, %v912
        %v914 = vmul.f32 %v874, %v913
        %v915 = vmul.f32 %v875, %v913
        %v916 = vmul.f32 %v876, %v913
        %v917 = vmul.f32 %v877, %v913
        %v918 = vmul.f32 %v878, %v913
        %v919 = vmul.f32 %v879, %v913
        %v920 = vmul.f32 %v880, %v913
        %v921 = vmul.f32 %v881, %v913
        %v922 = vadd.f32 %v902, %v914
        %v923 = vadd.f32 %v903, %v915
        %v924 = vadd.f32 %v904, %v916
        %v925 = vadd.f32 %v905, %v917
        %v926 = vadd.f32 %v906, %v918
        %v927 = vadd.f32 %v907, %v919
        %v928 = vadd.f32 %v908, %v920
        %v929 = vadd.f32 %v909, %v921
        %v930 = vlaneseq
        %v931 = vshrl.u32 %v930, 7
        %v932 = vsub.s32 2, %v931
        %v933 = vrot.slane %v255, %v932
        %v934 = vmul.f32 %v882, %v933
        %v935 = vmul.f32 %v883, %v933
        %v936 = vmul.f32 %v884, %v933
        %v937 = vmul.f32 %v885, %v933
        %v938 = vmul.f32 %v886, %v933
        %v939 = vmul.f32 %v887, %v933
        %v940 = vmul.f32 %v888, %v933
        %v941 = vmul.f32 %v889, %v933
        %v942 = vadd.f32 %v922, %v934
        %v943 = vadd.f32 %v923, %v935
        %v944 = vadd.f32 %v924, %v936
        %v945 = vadd.f32 %v925, %v937
        %v946 = vadd.f32 %v926, %v938
        %v947 = vadd.f32 %v927, %v939
        %v948 = vadd.f32 %v928, %v940
        %v949 = vadd.f32 %v929, %v941
        %v950 = vlaneseq
        %v951 = vshrl.u32 %v950, 7
        %v952 = vsub.s32 3, %v951
        %v953 = vrot.slane %v255, %v952
        %v954 = vmul.f32 %v890, %v953
        %v955 = vmul.f32 %v891, %v953
        %v956 = vmul.f32 %v892, %v953
        %v957 = vmul.f32 %v893, %v953
        %v958 = vmul.f32 %v894, %v953
        %v959 = vmul.f32 %v895, %v953
        %v960 = vmul.f32 %v896, %v953
        %v961 = vmul.f32 %v897, %v953
        %v962 = vadd.f32 %v942, %v954
        %v963 = vadd.f32 %v943, %v955
        %v964 = vadd.f32 %v944, %v956
        %v965 = vadd.f32 %v945, %v957
        %v966 = vadd.f32 %v946, %v958
        %v967 = vadd.f32 %v947, %v959
        %v968 = vadd.f32 %v948, %v960
        %v969 = vadd.f32 %v949, %v961
        %v970 = vlaneseq
        %v971 = vshrl.u32 %v970, 7
        %v972 = vsub.s32 0, %v971
        %v973 = vrot.slane %v258, %v972
        %v974 = vadd.f32 %v962, %v973
        %v975 = vadd.f32 %v963, %v973
        %v976 = vadd.f32 %v964, %v973
        %v977 = vadd.f32 %v965, %v973
        %v978 = vadd.f32 %v966, %v973
        %v979 = vadd.f32 %v967, %v973
        %v980 = vadd.f32 %v968, %v973
        %v981 = vadd.f32 %v969, %v973
        %v982 = vld [vmem:[%s3] sm:$0xff]
        %v983 = vld [vmem:[%s3 + $0x8] sm:$0xff]
        %v984 = vld [vmem:[%s3 + $0x10] sm:$0xff]
        %v985 = vld [vmem:[%s3 + $0x18] sm:$0xff]
        %v986 = vld [vmem:[%s3 + $0x20] sm:$0xff]
        %v987 = vld [vmem:[%s3 + $0x28] sm:$0xff]
        %v988 = vld [vmem:[%s3 + $0x30] sm:$0xff]
        %v989 = vld [vmem:[%s3 + $0x38] sm:$0xff]
        %v990 = vld [vmem:[%s3 + $0x40] sm:$0xff]
        %v991 = vld [vmem:[%s3 + $0x48] sm:$0xff]
        %v992 = vld [vmem:[%s3 + $0x50] sm:$0xff]
        %v993 = vld [vmem:[%s3 + $0x58] sm:$0xff]
        %v994 = vld [vmem:[%s3 + $0x60] sm:$0xff]
        %v995 = vld [vmem:[%s3 + $0x68] sm:$0xff]
        %v996 = vld [vmem:[%s3 + $0x70] sm:$0xff]
        %v997 = vld [vmem:[%s3 + $0x78] sm:$0xff]
        %v998 = vlaneseq
        %v999 = vshrl.u32 %v998, 7
        %v1000 = vsub.s32 0, %v999
        %v1001 = vrot.slane %v259, %v1000
        %1002 = vmatprep.subr.mxu0 0.0
        %1003 = vmatpush1.msra.mxu0 %v997
        %1004 = vmatprep.subr.mxu0 0.0
        %1005 = vmatpush1.msra.mxu0 %v996
        %1006 = vmatprep.subr.mxu0 0.0
        %1007 = vmatpush1.msra.mxu0 %v995
        %1008 = vmatprep.subr.mxu0 0.0
        %1009 = vmatpush1.msra.mxu0 %v994
        %1010 = vmatprep.subr.mxu0 0.0
        %1011 = vmatpush1.msra.mxu0 %v993
        %1012 = vmatprep.subr.mxu0 0.0
        %1013 = vmatpush1.msra.mxu0 %v992
        %1014 = vmatprep.subr.mxu0 0.0
        %1015 = vmatpush1.msra.mxu0 %v991
        %1016 = vmatprep.subr.mxu0 0.0
        %1017 = vmatpush1.msra.mxu0 %v990
        %1018 = vmatprep.subr.mxu0 0.0
        %1019 = vmatpush1.msra.mxu0 %v989
        %1020 = vmatprep.subr.mxu0 0.0
        %1021 = vmatpush1.msra.mxu0 %v988
        %1022 = vmatprep.subr.mxu0 0.0
        %1023 = vmatpush1.msra.mxu0 %v987
        %1024 = vmatprep.subr.mxu0 0.0
        %1025 = vmatpush1.msra.mxu0 %v986
        %1026 = vmatprep.subr.mxu0 0.0
        %1027 = vmatpush1.msra.mxu0 %v985
        %1028 = vmatprep.subr.mxu0 0.0
        %1029 = vmatpush1.msra.mxu0 %v984
        %1030 = vmatprep.subr.mxu0 0.0
        %1031 = vmatpush1.msra.mxu0 %v983
        %1032 = vmatprep.subr.mxu0 0.0
        %1033 = vmatpush1.msra.mxu0 %v982
        %1034 = vmatprep.subr.mxu0 0.0
        %1035 = vmatpush2.msra.mxu0 0.0
        %1036 = vmatprep.subr.mxu0 0.0
        %1037 = vmatpush2.msra.mxu0 0.0
        %1038 = vmatprep.subr.mxu0 0.0
        %1039 = vmatpush2.msra.mxu0 0.0
        %1040 = vmatprep.subr.mxu0 0.0
        %1041 = vmatpush2.msra.mxu0 0.0
        %1042 = vmatprep.subr.mxu0 0.0
        %1043 = vmatpush2.msra.mxu0 0.0
        %1044 = vmatprep.subr.mxu0 0.0
        %1045 = vmatpush2.msra.mxu0 0.0
        %1046 = vmatprep.subr.mxu0 0.0
        %1047 = vmatpush2.msra.mxu0 0.0
        %1048 = vmatprep.subr.mxu0 0.0
        %1049 = vmatpush2.msra.mxu0 0.0
        %1050 = vmatprep.subr.mxu0 0.0
        %1051 = vmatpush2.msra.mxu0 0.0
        %1052 = vmatprep.subr.mxu0 0.0
        %1053 = vmatpush2.msra.mxu0 0.0
        %1054 = vmatprep.subr.mxu0 0.0
        %1055 = vmatpush2.msra.mxu0 0.0
        %1056 = vmatprep.subr.mxu0 0.0
        %1057 = vmatpush2.msra.mxu0 0.0
        %1058 = vmatprep.subr.mxu0 0.0
        %1059 = vmatpush2.msra.mxu0 0.0
        %1060 = vmatprep.subr.mxu0 0.0
        %1061 = vmatpush2.msra.mxu0 0.0
        %1062 = vmatprep.subr.mxu0 0.0
        %1063 = vmatpush2.msra.mxu0 0.0
        %1064 = vmatprep.subr.mxu0 0.0
        %1065 = vmatpush2.msra.mxu0 0.0
        %1066 = vmatprep.mubr.f32.mxu0 0.0
        %1067 = vmatmul.mubr.f32.gmra.mxu0 %v974
        %v1068 = vpop.f32.mrf.mxu0
        %v1069 = vadd.f32 %v1001, %v1068
        %v1070 = vpop.f32.mrf.mxu0
        %1071 = vmatprep.mubr.f32.mxu0 0.0
        %1072 = vmatmul.mubr.f32.gmra.mxu0 %v975
        %v1073 = vpop.f32.mrf.mxu0
        %v1074 = vadd.f32 %v1001, %v1073
        %v1075 = vpop.f32.mrf.mxu0
        %1076 = vmatprep.mubr.f32.mxu0 0.0
        %1077 = vmatmul.mubr.f32.gmra.mxu0 %v976
        %v1078 = vpop.f32.mrf.mxu0
        %v1079 = vadd.f32 %v1001, %v1078
        %v1080 = vpop.f32.mrf.mxu0
        %1081 = vmatprep.mubr.f32.mxu0 0.0
        %1082 = vmatmul.mubr.f32.gmra.mxu0 %v977
        %v1083 = vpop.f32.mrf.mxu0
        %v1084 = vadd.f32 %v1001, %v1083
        %v1085 = vpop.f32.mrf.mxu0
        %1086 = vmatprep.mubr.f32.mxu0 0.0
        %1087 = vmatmul.mubr.f32.gmra.mxu0 %v978
        %v1088 = vpop.f32.mrf.mxu0
        %v1089 = vadd.f32 %v1001, %v1088
        %v1090 = vpop.f32.mrf.mxu0
        %1091 = vmatprep.mubr.f32.mxu0 0.0
        %1092 = vmatmul.mubr.f32.gmra.mxu0 %v979
        %v1093 = vpop.f32.mrf.mxu0
        %v1094 = vadd.f32 %v1001, %v1093
        %v1095 = vpop.f32.mrf.mxu0
        %1096 = vmatprep.mubr.f32.mxu0 0.0
        %1097 = vmatmul.mubr.f32.gmra.mxu0 %v980
        %v1098 = vpop.f32.mrf.mxu0
        %v1099 = vadd.f32 %v1001, %v1098
        %v1100 = vpop.f32.mrf.mxu0
        %1101 = vmatprep.mubr.f32.mxu0 0.0
        %1102 = vmatmul.mubr.f32.gmra.mxu0 %v981
        %v1103 = vpop.f32.mrf.mxu0
        %v1104 = vadd.f32 %v1001, %v1103
        %v1105 = vpop.f32.mrf.mxu0
        %1106 = vdwg.mxu0
        %1107 = vadd.xlane.f32.xlu0 %v1069
        %v1108 = vpop.xlane.xlu0 %1107
        %1109 = vadd.xlane.f32.xlu0 %v1074
        %v1110 = vpop.xlane.xlu0 %1109
        %1111 = vadd.xlane.f32.xlu0 %v1079
        %v1112 = vpop.xlane.xlu0 %1111
        %1113 = vadd.xlane.f32.xlu0 %v1084
        %v1114 = vpop.xlane.xlu0 %1113
        %1115 = vadd.xlane.f32.xlu0 %v1089
        %v1116 = vpop.xlane.xlu0 %1115
        %1117 = vadd.xlane.f32.xlu0 %v1094
        %v1118 = vpop.xlane.xlu0 %1117
        %1119 = vadd.xlane.f32.xlu0 %v1099
        %v1120 = vpop.xlane.xlu0 %1119
        %1121 = vadd.xlane.f32.xlu0 %v1104
        %v1122 = vpop.xlane.xlu0 %1121
        %v1123 = vadd.f32 %v1108, %v1110
        %v1124 = vadd.f32 %v1123, %v1112
        %v1125 = vadd.f32 %v1124, %v1114
        %v1126 = vadd.f32 %v1125, %v1116
        %v1127 = vadd.f32 %v1126, %v1118
        %v1128 = vadd.f32 %v1127, %v1120
        %v1129 = vadd.f32 %v1128, %v1122
        %v1130 = vrot.slane %v1129, 4
        %v1131 = vadd.f32 %v1129, %v1130
        %v1132 = vrot.slane %v1131, 2
        %v1133 = vadd.f32 %v1131, %v1132
        %v1134 = vrot.slane %v1133, 1
        %v1135 = vadd.f32 %v1133, %v1134
        %v1136 = vmul.f32 %v1069, %v1069
        %v1137 = vmul.f32 %v1074, %v1074
        %v1138 = vmul.f32 %v1079, %v1079
        %v1139 = vmul.f32 %v1084, %v1084
        %v1140 = vmul.f32 %v1089, %v1089
        %v1141 = vmul.f32 %v1094, %v1094
        %v1142 = vmul.f32 %v1099, %v1099
        %v1143 = vmul.f32 %v1104, %v1104
        %1144 = vadd.xlane.f32.xlu0 %v1136
        %v1145 = vpop.xlane.xlu0 %1144
        %1146 = vadd.xlane.f32.xlu0 %v1137
        %v1147 = vpop.xlane.xlu0 %1146
        %1148 = vadd.xlane.f32.xlu0 %v1138
        %v1149 = vpop.xlane.xlu0 %1148
        %1150 = vadd.xlane.f32.xlu0 %v1139
        %v1151 = vpop.xlane.xlu0 %1150
        %1152 = vadd.xlane.f32.xlu0 %v1140
        %v1153 = vpop.xlane.xlu0 %1152
        %1154 = vadd.xlane.f32.xlu0 %v1141
        %v1155 = vpop.xlane.xlu0 %1154
        %1156 = vadd.xlane.f32.xlu0 %v1142
        %v1157 = vpop.xlane.xlu0 %1156
        %1158 = vadd.xlane.f32.xlu0 %v1143
        %v1159 = vpop.xlane.xlu0 %1158
        %v1160 = vadd.f32 %v1145, %v1147
        %v1161 = vadd.f32 %v1160, %v1149
        %v1162 = vadd.f32 %v1161, %v1151
        %v1163 = vadd.f32 %v1162, %v1153
        %v1164 = vadd.f32 %v1163, %v1155
        %v1165 = vadd.f32 %v1164, %v1157
        %v1166 = vadd.f32 %v1165, %v1159
        %v1167 = vrot.slane %v1166, 4
        %v1168 = vadd.f32 %v1166, %v1167
        %v1169 = vrot.slane %v1168, 2
        %v1170 = vadd.f32 %v1168, %v1169
        %v1171 = vrot.slane %v1170, 1
        %v1172 = vadd.f32 %v1170, %v1171
        %v1173 = vrcp.pop 8192.0
        %v1174 = vmul.f32 %v1135, %v1173
        %v1175 = vmul.f32 %v1172, %v1173
        %v1176 = vmul.f32 %v1174, %v1174
        %v1177 = vsub.f32 %v1175, %v1176
        %v1178 = vadd.f32 %v1177, 1e-05
        %v1179 = vrsqrt.pop %v1178
        %v1180 = vmul.f32 %v1179, %v260
        %v1181 = vmul.f32 %v1174, %v1180
        %v1182 = vsub.f32 %v261, %v1181
        %v1183 = vadd.f32 %v223, %v231
        %v1184 = vadd.f32 %v224, %v232
        %v1185 = vadd.f32 %v225, %v233
        %v1186 = vadd.f32 %v226, %v234
        %v1187 = vadd.f32 %v227, %v235
        %v1188 = vadd.f32 %v228, %v236
        %v1189 = vadd.f32 %v229, %v237
        %v1190 = vadd.f32 %v230, %v238
        %v1191 = vadd.f32 %v1183, %v239
        %v1192 = vadd.f32 %v1184, %v240
        %v1193 = vadd.f32 %v1185, %v241
        %v1194 = vadd.f32 %v1186, %v242
        %v1195 = vadd.f32 %v1187, %v243
        %v1196 = vadd.f32 %v1188, %v244
        %v1197 = vadd.f32 %v1189, %v245
        %v1198 = vadd.f32 %v1190, %v246
        %v1199 = vadd.f32 %v1191, %v247
        %v1200 = vadd.f32 %v1192, %v248
        %v1201 = vadd.f32 %v1193, %v249
        %v1202 = vadd.f32 %v1194, %v250
        %v1203 = vadd.f32 %v1195, %v251
        %v1204 = vadd.f32 %v1196, %v252
        %v1205 = vadd.f32 %v1197, %v253
        %v1206 = vadd.f32 %v1198, %v254
        %v1207 = vmul.f32 %v1199, 0.25
        %v1208 = vmul.f32 %v1200, 0.25
        %v1209 = vmul.f32 %v1201, 0.25
        %v1210 = vmul.f32 %v1202, 0.25
        %v1211 = vmul.f32 %v1203, 0.25
        %v1212 = vmul.f32 %v1204, 0.25
        %v1213 = vmul.f32 %v1205, 0.25
        %v1214 = vmul.f32 %v1206, 0.25
        %v1215 = vld [vmem:[%s1] sm:$0xf]
        %v1216 = vlaneseq
        %v1217 = vshrl.u32 %v1216, 7
        %v1218 = vsub.s32 0, %v1217
        %v1219 = vrot.slane %v256, %v1218
        %v1221 = vsel %vm267, %v1207, 0
        %v1224 = vsel %vm267, %v1208, 0
        %v1227 = vsel %vm267, %v1209, 0
        %v1230 = vsel %vm267, %v1210, 0
        %v1233 = vsel %vm267, %v1211, 0
        %v1236 = vsel %vm267, %v1212, 0
        %v1239 = vsel %vm267, %v1213, 0
        %v1242 = vsel %vm267, %v1214, 0
        %v1245 = vsel %vm364, %v1215, 0
        %1247 = vmatprep.subr.mxu0 0.0
        %1248 = vmatpush1.msra.mxu0 0.0
        %1249 = vmatprep.subr.mxu0 0.0
        %1250 = vmatpush1.msra.mxu0 0.0
        %1251 = vmatprep.subr.mxu0 0.0
        %1252 = vmatpush1.msra.mxu0 0.0
        %1253 = vmatprep.subr.mxu0 0.0
        %1254 = vmatpush1.msra.mxu0 0.0
        %1255 = vmatprep.subr.mxu0 0.0
        %1256 = vmatpush1.msra.mxu0 0.0
        %1257 = vmatprep.subr.mxu0 0.0
        %1258 = vmatpush1.msra.mxu0 0.0
        %1259 = vmatprep.subr.mxu0 0.0
        %1260 = vmatpush1.msra.mxu0 0.0
        %1261 = vmatprep.subr.mxu0 0.0
        %1262 = vmatpush1.msra.mxu0 0.0
        %1263 = vmatprep.subr.mxu0 0.0
        %1264 = vmatpush1.msra.mxu0 0.0
        %1265 = vmatprep.subr.mxu0 0.0
        %1266 = vmatpush1.msra.mxu0 0.0
        %1267 = vmatprep.subr.mxu0 0.0
        %1268 = vmatpush1.msra.mxu0 0.0
        %1269 = vmatprep.subr.mxu0 0.0
        %1270 = vmatpush1.msra.mxu0 0.0
        %1271 = vmatprep.subr.mxu0 0.0
        %1272 = vmatpush1.msra.mxu0 0.0
        %1273 = vmatprep.subr.mxu0 0.0
        %1274 = vmatpush1.msra.mxu0 0.0
        %1275 = vmatprep.subr.mxu0 0.0
        %1276 = vmatpush1.msra.mxu0 0.0
        %1277 = vmatprep.subr.mxu0 0.0
        %1278 = vmatpush1.msra.mxu0 %v1245
        %1279 = vmatprep.subr.mxu0 0.0
        %1280 = vmatpush2.msra.mxu0 0.0
        %1281 = vmatprep.subr.mxu0 0.0
        %1282 = vmatpush2.msra.mxu0 0.0
        %1283 = vmatprep.subr.mxu0 0.0
        %1284 = vmatpush2.msra.mxu0 0.0
        %1285 = vmatprep.subr.mxu0 0.0
        %1286 = vmatpush2.msra.mxu0 0.0
        %1287 = vmatprep.subr.mxu0 0.0
        %1288 = vmatpush2.msra.mxu0 0.0
        %1289 = vmatprep.subr.mxu0 0.0
        %1290 = vmatpush2.msra.mxu0 0.0
        %1291 = vmatprep.subr.mxu0 0.0
        %1292 = vmatpush2.msra.mxu0 0.0
        %1293 = vmatprep.subr.mxu0 0.0
        %1294 = vmatpush2.msra.mxu0 0.0
        %1295 = vmatprep.subr.mxu0 0.0
        %1296 = vmatpush2.msra.mxu0 0.0
        %1297 = vmatprep.subr.mxu0 0.0
        %1298 = vmatpush2.msra.mxu0 0.0
        %1299 = vmatprep.subr.mxu0 0.0
        %1300 = vmatpush2.msra.mxu0 0.0
        %1301 = vmatprep.subr.mxu0 0.0
        %1302 = vmatpush2.msra.mxu0 0.0
        %1303 = vmatprep.subr.mxu0 0.0
        %1304 = vmatpush2.msra.mxu0 0.0
        %1305 = vmatprep.subr.mxu0 0.0
        %1306 = vmatpush2.msra.mxu0 0.0
        %1307 = vmatprep.subr.mxu0 0.0
        %1308 = vmatpush2.msra.mxu0 0.0
        %1309 = vmatprep.subr.mxu0 0.0
        %1310 = vmatpush2.msra.mxu0 0.0
        %1311 = vmatprep.mubr.f32.mxu0 0.0
        %1312 = vmatmul.mubr.f32.gmra.mxu0 %v1221
        %v1313 = vpop.f32.mrf.mxu0
        %v1314 = vadd.f32 %v1219, %v1313
        %v1315 = vpop.f32.mrf.mxu0
        %1316 = vmatprep.mubr.f32.mxu0 0.0
        %1317 = vmatmul.mubr.f32.gmra.mxu0 %v1224
        %v1318 = vpop.f32.mrf.mxu0
        %v1319 = vadd.f32 %v1219, %v1318
        %v1320 = vpop.f32.mrf.mxu0
        %1321 = vmatprep.mubr.f32.mxu0 0.0
        %1322 = vmatmul.mubr.f32.gmra.mxu0 %v1227
        %v1323 = vpop.f32.mrf.mxu0
        %v1324 = vadd.f32 %v1219, %v1323
        %v1325 = vpop.f32.mrf.mxu0
        %1326 = vmatprep.mubr.f32.mxu0 0.0
        %1327 = vmatmul.mubr.f32.gmra.mxu0 %v1230
        %v1328 = vpop.f32.mrf.mxu0
        %v1329 = vadd.f32 %v1219, %v1328
        %v1330 = vpop.f32.mrf.mxu0
        %1331 = vmatprep.mubr.f32.mxu0 0.0
        %1332 = vmatmul.mubr.f32.gmra.mxu0 %v1233
        %v1333 = vpop.f32.mrf.mxu0
        %v1334 = vadd.f32 %v1219, %v1333
        %v1335 = vpop.f32.mrf.mxu0
        %1336 = vmatprep.mubr.f32.mxu0 0.0
        %1337 = vmatmul.mubr.f32.gmra.mxu0 %v1236
        %v1338 = vpop.f32.mrf.mxu0
        %v1339 = vadd.f32 %v1219, %v1338
        %v1340 = vpop.f32.mrf.mxu0
        %1341 = vmatprep.mubr.f32.mxu0 0.0
        %1342 = vmatmul.mubr.f32.gmra.mxu0 %v1239
        %v1343 = vpop.f32.mrf.mxu0
        %v1344 = vadd.f32 %v1219, %v1343
        %v1345 = vpop.f32.mrf.mxu0
        %1346 = vmatprep.mubr.f32.mxu0 0.0
        %1347 = vmatmul.mubr.f32.gmra.mxu0 %v1242
        %v1348 = vpop.f32.mrf.mxu0
        %v1349 = vadd.f32 %v1219, %v1348
        %v1350 = vpop.f32.mrf.mxu0
        %1351 = vdwg.mxu0
        %v1352 = vlaneseq
        %v1353 = vshrl.u32 %v1352, 7
        %v1354 = vsub.s32 0, %v1353
        %v1355 = vrot.slane %v1180, %v1354
        %v1356 = vmul.f32 %v1069, %v1355
        %v1357 = vmul.f32 %v1074, %v1355
        %v1358 = vmul.f32 %v1079, %v1355
        %v1359 = vmul.f32 %v1084, %v1355
        %v1360 = vmul.f32 %v1089, %v1355
        %v1361 = vmul.f32 %v1094, %v1355
        %v1362 = vmul.f32 %v1099, %v1355
        %v1363 = vmul.f32 %v1104, %v1355
        %v1364 = vlaneseq
        %v1365 = vshrl.u32 %v1364, 7
        %v1366 = vsub.s32 0, %v1365
        %v1367 = vrot.slane %v1182, %v1366
        %v1368 = vadd.f32 %v1356, %v1367
        %v1369 = vadd.f32 %v1357, %v1367
        %v1370 = vadd.f32 %v1358, %v1367
        %v1371 = vadd.f32 %v1359, %v1367
        %v1372 = vadd.f32 %v1360, %v1367
        %v1373 = vadd.f32 %v1361, %v1367
        %v1374 = vadd.f32 %v1362, %v1367
        %v1375 = vadd.f32 %v1363, %v1367
        %v1376 = vadd.f32 %v1368, %v1314
        %v1377 = vadd.f32 %v1369, %v1319
        %v1378 = vadd.f32 %v1370, %v1324
        %v1379 = vadd.f32 %v1371, %v1329
        %v1380 = vadd.f32 %v1372, %v1334
        %v1381 = vadd.f32 %v1373, %v1339
        %v1382 = vadd.f32 %v1374, %v1344
        %v1383 = vadd.f32 %v1375, %v1349
        %1384 = vst [vmem:[%s217] sm:$0xff] %v1376
        %1385 = vst [vmem:[%s217 + $0x8] sm:$0xff] %v1377
        %1386 = vst [vmem:[%s217 + $0x10] sm:$0xff] %v1378
        %1387 = vst [vmem:[%s217 + $0x18] sm:$0xff] %v1379
        %1388 = vst [vmem:[%s217 + $0x20] sm:$0xff] %v1380
        %1389 = vst [vmem:[%s217 + $0x28] sm:$0xff] %v1381
        %1390 = vst [vmem:[%s217 + $0x30] sm:$0xff] %v1382
        %1391 = vst [vmem:[%s217 + $0x38] sm:$0xff] %v1383
        %s1392 = sand.u32 %s137, 1
        %s1393 = scalar_lea.sflag [#allocation3], %s1392
        %s1394 = sand.u32 %s137, 1
        %s1395 = smul.addr %s1394, 64
        %s1396 = scalar_lea.vmem [#allocation2], %s1395
        // Predicated region
        $region41: #{tpu_custom_call.1} parent=39 // pred_check
          %p1397 = pneg %p147
        $region42: #{tpu_custom_call.1} parent=39 // pred_check_branch
          %1399 = sbr.rel (%p1397) target = $region44
        $region43: #{tpu_custom_call.1} parent=39 // pred_region
          %s1401 = ssub.s32 1024, 1024
          %1402 = vsyncadd %s1393, %s1401
          %s1403 = smul.addr %s19, 8
          %s1404 = smul.addr %s1403, 128
          %s1405 = scalar_lea.hbm %s5, %s1404
          %s1406 = sshll.u32 %s1396, 4
          %s1407 = int_to_ptr.vmem [resolvable:$true] %s1406
          %1412 = dma.vmem_to_hbm [thread:$0]  %s1407, 1024, %s1405, %s1393, 128, 128, 8
        $region44: #{tpu_custom_call.1} parent=39 // pred_fallthru
          _
      $region40: #{tpu_custom_call.1} parent=5 // pred_fallthru
        _
      %p1413 = scmp.le.s32.totalorder 2, %s14
      // Predicated region
      $region45: #{tpu_custom_call.1} parent=5 // pred_check
        %p1414 = pneg %p1413
      $region46: #{tpu_custom_call.1} parent=5 // pred_check_branch
        %1416 = sbr.rel (%p1414) target = $region48
      $region47: #{tpu_custom_call.1} parent=5 // pred_region
        %s1417 = ssub.s32 %s14, 2
        // Predicated region
        $region49: #{tpu_custom_call.1} parent=47 // pred_check
          %p1418 = pneg %p153
        $region50: #{tpu_custom_call.1} parent=47 // pred_check_branch
          %1420 = sbr.rel (%p1418) target = $region52
        $region51: #{tpu_custom_call.1} parent=47 // pred_region
          %s1421 = sand.u32 %s138, 1
          %s1422 = scalar_lea.sflag [#allocation3], %s1421
          %s1423 = sand.u32 %s138, 1
          %s1424 = smul.addr %s1423, 64
          %s1425 = scalar_lea.vmem [#allocation2], %s1424
          %1426 = dma.done %s1422, 1024
        $region52: #{tpu_custom_call.1} parent=47 // pred_fallthru
          _
      $region48: #{tpu_custom_call.1} parent=5 // pred_fallthru
        _
    $region6: #{tpu_custom_call.1} parent=1 // loop_footer
      %s18 = sadd.s32 1, %s14
    $region7: #{tpu_custom_call.1} parent=1 // loop_footer_branch
      %13 = sbr.rel target = $region3
    $region8: #{tpu_custom_call.1} parent=1 // loop_exit
      _
    %1427 = vsyncpa [#allocation3], 1
    %s1428 = scalar_lea.sflag [#allocation3], 1
    %1429 = vsyncpa %s1428, 1

</llo_original>
